<compile_context>
chip_gen: v7x
topology: tpu7x:2x2x1
jax: 0.10.0
libtpu: 0.0.40
codegen_flags: <defaults>
</compile_context>

<pallas_src>
import functools

import jax
import jax.numpy as jnp
from jax.experimental import pallas as pl
from jax.experimental.pallas import tpu as pltpu

_LANE = 128
_MASK_BIAS = -1e30  # large finite negative bias instead of -inf (no NaN rows)


def _gat_fused_kernel(x_ref, xt_ref, w1_ref, wal1_ref, war1t_ref, bias_ref,
                      w2_ref, wal2_ref, war2_ref, o_ref,
                      *, n_heads, f_hidden, negative_slope):
    x = x_ref[...]            # (N, F_in)
    xt = xt_ref[...]          # (F_in, N)  (wrapper-side transpose of x)
    bias = bias_ref[...]      # (N, N) additive adjacency bias (0 / -1e30)

    # ---------------- layer 1: all heads fused --------------------------
    g1 = jnp.dot(x, w1_ref[...], preferred_element_type=jnp.float32)        # (N, H*F)
    el1 = jnp.dot(x, wal1_ref[...], preferred_element_type=jnp.float32)     # (N, H)
    er1t = jnp.dot(war1t_ref[...], xt, preferred_element_type=jnp.float32)  # (H, N)

    acc = jnp.zeros((x.shape[0], f_hidden), dtype=jnp.float32)
    for h in range(n_heads):                              # static unroll (H small)
        s = el1[:, h:h + 1] + er1t[h:h + 1, :]            # (N, N): a_l.g_i + a_r.g_j
        s = jnp.where(s >= 0, s, negative_slope * s)      # LeakyReLU
        e = s + bias                                      # masked_fill(adj==0, -1e30)
        e_max = jnp.max(e, axis=1, keepdims=True)
        p = jnp.exp(e - e_max)
        inv = pl.reciprocal(jnp.sum(p, axis=1, keepdims=True), approx=True)
        a = p * inv                                       # softmax over j
        g_h = g1[:, h * f_hidden:(h + 1) * f_hidden]
        acc = acc + jnp.dot(a, g_h, preferred_element_type=jnp.float32)
    h1 = acc * (1.0 / n_heads)                            # mean over heads (is_concat=False)

    # ---------------- ELU between layers (exp arg clamped) --------------
    h1 = jnp.where(h1 > 0, h1, jnp.exp(jnp.minimum(h1, 0.0)) - 1.0)

    # ---------------- layer 2: single head, lane-dense padded output ----
    g2 = jnp.dot(h1, w2_ref[...], preferred_element_type=jnp.float32)       # (N, 128)
    el2 = jnp.dot(h1, wal2_ref[...], preferred_element_type=jnp.float32)    # (N, 1)
    er2 = jnp.dot(h1, war2_ref[...], preferred_element_type=jnp.float32)    # (N, 1)
    s2 = el2 + er2.T
    s2 = jnp.where(s2 >= 0, s2, negative_slope * s2)
    e2 = s2 + bias
    e2_max = jnp.max(e2, axis=1, keepdims=True)
    p2 = jnp.exp(e2 - e2_max)
    inv2 = pl.reciprocal(jnp.sum(p2, axis=1, keepdims=True), approx=True)
    a2 = p2 * inv2
    o_ref[...] = jnp.dot(a2, g2, preferred_element_type=jnp.float32)


def gat_forward(x, adj_mat, params, n_heads, negative_slope=0.2):
    """GAT.forward: dropout (identity) -> layer1 -> ELU -> dropout -> output."""
    n, f_in = x.shape
    w1, a1 = params["w1"], params["a1"]
    w2, a2 = params["w2"], params["a2"]
    f_hidden = w1.shape[0] // n_heads
    n_classes = w2.shape[0]
    f_out_pad = ((n_classes + _LANE - 1) // _LANE) * _LANE

    # layer-1 weights: torch nn.Linear weight (H*F, F_in) -> head-major (F_in, H*F)
    w1_stack = w1.T.astype(jnp.float32)                       # (F_in, H*F_hidden)
    w1_3d = w1_stack.reshape(f_in, n_heads, f_hidden)
    a1_vec = a1.reshape(-1)
    wal1 = jnp.einsum("ihf,f->ih", w1_3d, a1_vec[:f_hidden])   # (F_in, H): W_h @ a_l
    war1t = jnp.einsum("ihf,f->hi", w1_3d, a1_vec[f_hidden:])  # (H, F_in): (W_h @ a_r)^T

    # layer-2 weights (single head), zero-padded to a full lane group
    w2_t = w2.T.astype(jnp.float32)                            # (F_hidden, n_classes)
    w2_pad = jnp.pad(w2_t, ((0, 0), (0, f_out_pad - n_classes)))
    a2_vec = a2.reshape(-1)
    wal2 = (w2_t @ a2_vec[:n_classes]).reshape(f_hidden, 1)
    war2 = (w2_t @ a2_vec[n_classes:]).reshape(f_hidden, 1)

    # additive adjacency bias, shared by both layers
    adj = adj_mat[..., 0] if adj_mat.ndim == 3 else adj_mat
    bias = jnp.where(adj != 0, 0.0, _MASK_BIAS).astype(jnp.float32)

    xt = x.T.astype(jnp.float32)   # row-layout source for er1 (layout plumbing)

    kernel = functools.partial(_gat_fused_kernel, n_heads=n_heads,
                               f_hidden=f_hidden, negative_slope=negative_slope)

    out_pad = pl.pallas_call(
        kernel,
        out_shape=jax.ShapeDtypeStruct((n, f_out_pad), jnp.float32),
        grid_spec=pltpu.PrefetchScalarGridSpec(
            num_scalar_prefetch=0,
            grid=(1,),
            in_specs=[
                pl.BlockSpec((n, f_in), lambda i: (0, 0)),                    # x
                pl.BlockSpec((f_in, n), lambda i: (0, 0)),                    # x.T
                pl.BlockSpec((f_in, n_heads * f_hidden), lambda i: (0, 0)),   # W1 stacked
                pl.BlockSpec((f_in, n_heads), lambda i: (0, 0)),              # W1 @ a_l
                pl.BlockSpec((n_heads, f_in), lambda i: (0, 0)),              # (W1 @ a_r)^T
                pl.BlockSpec((n, n), lambda i: (0, 0)),                       # adjacency bias
                pl.BlockSpec((f_hidden, f_out_pad), lambda i: (0, 0)),        # W2 (padded)
                pl.BlockSpec((f_hidden, 1), lambda i: (0, 0)),                # W2 @ a_l2
                pl.BlockSpec((f_hidden, 1), lambda i: (0, 0)),                # W2 @ a_r2
            ],
            out_specs=pl.BlockSpec((n, f_out_pad), lambda i: (0, 0)),
        ),
        compiler_params=pltpu.CompilerParams(
            dimension_semantics=("arbitrary",)),
    )(x.astype(jnp.float32), xt, w1_stack, wal1, war1t, bias, w2_pad, wal2, war2)

    return out_pad[:, :n_classes]


# ---------------- pure-JAX reference (mirrors the torch code) ----------------
def _gat_layer_ref(x, lin_weight, attn_weight, adj, n_heads, negative_slope=0.2):
    n, _ = x.shape
    f_out = lin_weight.shape[0] // n_heads
    g = (x @ lin_weight.T).reshape(n, n_heads, f_out)
    a_vec = attn_weight.reshape(-1)
    a_l, a_r = a_vec[:f_out], a_vec[f_out:]
    el = jnp.einsum("nhf,f->nh", g, a_l)
    er = jnp.einsum("nhf,f->nh", g, a_r)
    e = el[:, None, :] + er[None, :, :]                   # (i, j, h)
    e = jnp.where(e >= 0, e, negative_slope * e)
    e = jnp.where(adj[:, :, None] != 0, e, -jnp.inf)
    att = jax.nn.softmax(e, axis=1)
    res = jnp.einsum("ijh,jhf->ihf", att, g)
    return res.mean(axis=1)


def _gat_forward_ref(x, adj_mat, params, n_heads):
    adj = (adj_mat[..., 0] != 0).astype(jnp.float32)
    h = jax.nn.elu(_gat_layer_ref(x, params["w1"], params["a1"], adj, n_heads))
    return _gat_layer_ref(h, params["w2"], params["a2"], adj, 1)


if __name__ == "__main__":
    # Small, module-consistent shapes.
    n_nodes, in_features, n_hidden, n_classes, n_heads = 16, 8, 32, 4, 4

    key = jax.random.PRNGKey(0)
    k_x, k_w1, k_a1, k_w2, k_a2 = jax.random.split(key, 5)

    x = jax.random.normal(k_x, (n_nodes, in_features), dtype=jnp.float32)

    # Adjacency: ring + self loops, shaped (N, N, 1) like the torch module expects.
    idx = jnp.arange(n_nodes)
    ring = (idx[:, None] - idx[None, :]) % n_nodes
    adj2d = ((ring == 0) | (ring == 1) | (ring == n_nodes - 1)).astype(jnp.float32)
    adj_mat = adj2d[:, :, None]

    # Deterministic parameter init (torch nn.Linear weight shapes, bias=False).
    def uinit(k, shape, fan_in):
        bound = 1.0 / (fan_in ** 0.5)
        return jax.random.uniform(k, shape, jnp.float32, -bound, bound)

    params = {
        "w1": uinit(k_w1, (n_hidden * n_heads, in_features), in_features),
        "a1": uinit(k_a1, (1, 2 * n_hidden), 2 * n_hidden),
        "w2": uinit(k_w2, (n_classes, n_hidden), n_hidden),
        "a2": uinit(k_a2, (1, 2 * n_classes), 2 * n_classes),
    }

    fwd = jax.jit(gat_forward, static_argnums=(3,))
    out = jax.block_until_ready(fwd(x, adj_mat, params, n_heads))

    ref = _gat_forward_ref(x, adj_mat, params, n_heads)
    assert out.shape == (n_nodes, n_classes)
    # approx=True reciprocal (EUP vrcp) introduces a small relative error per
    # softmax; tolerance is accordingly a bit looser than a pure-f32 compare.
    assert jnp.allclose(out, ref, atol=5e-3, rtol=5e-3), (
        f"max abs err {jnp.max(jnp.abs(out - ref))}")

    print("KERNEL_OK")
</pallas_src>

<mosaic_0001>
module attributes {stable_mosaic.version = 11 : i64} {
  func.func @_gat_fused_kernel(%arg0: i32, %arg1: memref<16x8xf32, #tpu.memory_space<vmem>>, %arg2: memref<8x16xf32, #tpu.memory_space<vmem>>, %arg3: memref<8x128xf32, #tpu.memory_space<vmem>>, %arg4: memref<8x4xf32, #tpu.memory_space<vmem>>, %arg5: memref<4x8xf32, #tpu.memory_space<vmem>>, %arg6: memref<16x16xf32, #tpu.memory_space<vmem>>, %arg7: memref<32x128xf32, #tpu.memory_space<vmem>>, %arg8: memref<32x1xf32, #tpu.memory_space<vmem>>, %arg9: memref<32x1xf32, #tpu.memory_space<vmem>>, %arg10: memref<16x128xf32, #tpu.memory_space<vmem>>) attributes {dimension_semantics = [#tpu.dimension_semantics<arbitrary>], iteration_bounds = array<i64: 1>, scalar_prefetch = 0 : i64, scratch_operands = 0 : i64, tpu.core_type = #tpu.core_type<tc>, window_params = [{pipeline_mode = #tpu.pipeline_mode<synchronous>, transform_indices = @transform_0, window_bounds = array<i64: 16, 8>}, {pipeline_mode = #tpu.pipeline_mode<synchronous>, transform_indices = @transform_1, window_bounds = array<i64: 8, 16>}, {pipeline_mode = #tpu.pipeline_mode<synchronous>, transform_indices = @transform_2, window_bounds = array<i64: 8, 128>}, {pipeline_mode = #tpu.pipeline_mode<synchronous>, transform_indices = @transform_3, window_bounds = array<i64: 8, 4>}, {pipeline_mode = #tpu.pipeline_mode<synchronous>, transform_indices = @transform_4, window_bounds = array<i64: 4, 8>}, {pipeline_mode = #tpu.pipeline_mode<synchronous>, transform_indices = @transform_5, window_bounds = array<i64: 16, 16>}, {pipeline_mode = #tpu.pipeline_mode<synchronous>, transform_indices = @transform_6, window_bounds = array<i64: 32, 128>}, {pipeline_mode = #tpu.pipeline_mode<synchronous>, transform_indices = @transform_7, window_bounds = array<i64: 32, 1>}, {pipeline_mode = #tpu.pipeline_mode<synchronous>, transform_indices = @transform_8, window_bounds = array<i64: 32, 1>}, {pipeline_mode = #tpu.pipeline_mode<synchronous>, transform_indices = @transform_9, window_bounds = array<i64: 16, 128>}]} {
    %c0 = arith.constant 0 : index
    %c0_0 = arith.constant 0 : index
    %0 = vector.load %arg1[%c0, %c0_0] : memref<16x8xf32, #tpu.memory_space<vmem>>, vector<16x8xf32>
    %c0_1 = arith.constant 0 : index
    %c0_2 = arith.constant 0 : index
    %1 = vector.load %arg2[%c0_1, %c0_2] : memref<8x16xf32, #tpu.memory_space<vmem>>, vector<8x16xf32>
    %c0_3 = arith.constant 0 : index
    %c0_4 = arith.constant 0 : index
    %2 = vector.load %arg6[%c0_3, %c0_4] : memref<16x16xf32, #tpu.memory_space<vmem>>, vector<16x16xf32>
    %c0_5 = arith.constant 0 : index
    %c0_6 = arith.constant 0 : index
    %3 = vector.load %arg3[%c0_5, %c0_6] : memref<8x128xf32, #tpu.memory_space<vmem>>, vector<8x128xf32>
    %cst = arith.constant dense<0.000000e+00> : vector<16x128xf32>
    %4 = tpu.matmul %0, %3, %cst {dimension_numbers = #tpu.dot_dimension_numbers<[1], [0], [0], [1], [0, 0, 1, 1], [], []>} : vector<16x8xf32>, vector<8x128xf32>, vector<16x128xf32> -> vector<16x128xf32>
    %c0_7 = arith.constant 0 : index
    %c0_8 = arith.constant 0 : index
    %5 = vector.load %arg4[%c0_7, %c0_8] : memref<8x4xf32, #tpu.memory_space<vmem>>, vector<8x4xf32>
    %cst_9 = arith.constant dense<0.000000e+00> : vector<16x4xf32>
    %6 = tpu.matmul %0, %5, %cst_9 {dimension_numbers = #tpu.dot_dimension_numbers<[1], [0], [0], [1], [0, 0, 1, 1], [], []>} : vector<16x8xf32>, vector<8x4xf32>, vector<16x4xf32> -> vector<16x4xf32>
    %c0_10 = arith.constant 0 : index
    %c0_11 = arith.constant 0 : index
    %7 = vector.load %arg5[%c0_10, %c0_11] : memref<4x8xf32, #tpu.memory_space<vmem>>, vector<4x8xf32>
    %cst_12 = arith.constant dense<0.000000e+00> : vector<4x16xf32>
    %8 = tpu.matmul %7, %1, %cst_12 {dimension_numbers = #tpu.dot_dimension_numbers<[1], [0], [0], [1], [0, 0, 1, 1], [], []>} : vector<4x8xf32>, vector<8x16xf32>, vector<4x16xf32> -> vector<4x16xf32>
    %cst_13 = arith.constant 0.000000e+00 : f32
    %9 = vector.broadcast %cst_13 : f32 to vector<16x32xf32>
    %10 = vector.extract_strided_slice %6 {offsets = [0, 0], sizes = [16, 1], strides = [1, 1]} : vector<16x4xf32> to vector<16x1xf32>
    %11 = vector.extract_strided_slice %8 {offsets = [0, 0], sizes = [1, 16], strides = [1, 1]} : vector<4x16xf32> to vector<1x16xf32>
    %12 = vector.broadcast %10 : vector<16x1xf32> to vector<16x16xf32>
    %13 = vector.broadcast %11 : vector<1x16xf32> to vector<16x16xf32>
    %14 = arith.addf %12, %13 : vector<16x16xf32>
    %cst_14 = arith.constant 0.000000e+00 : f32
    %15 = vector.broadcast %cst_14 : f32 to vector<16x16xf32>
    %16 = arith.cmpf oge, %14, %15 : vector<16x16xf32>
    %cst_15 = arith.constant 2.000000e-01 : f32
    %17 = vector.broadcast %cst_15 : f32 to vector<16x16xf32>
    %18 = arith.mulf %17, %14 : vector<16x16xf32>
    %19 = arith.select %16, %14, %18 : vector<16x16xi1>, vector<16x16xf32>
    %20 = arith.addf %19, %2 : vector<16x16xf32>
    %cst_16 = arith.constant dense<0xFF800000> : vector<16xf32>
    %21 = vector.multi_reduction <maximumf>, %20, %cst_16 [1] : vector<16x16xf32> to vector<16xf32>
    %22 = vector.shape_cast %21 : vector<16xf32> to vector<16x1xf32>
    %23 = vector.broadcast %22 : vector<16x1xf32> to vector<16x16xf32>
    %24 = arith.subf %20, %23 : vector<16x16xf32>
    %25 = math.exp %24 : vector<16x16xf32>
    %cst_17 = arith.constant dense<0.000000e+00> : vector<16xf32>
    %26 = vector.multi_reduction <add>, %25, %cst_17 [1] : vector<16x16xf32> to vector<16xf32>
    %27 = vector.shape_cast %26 : vector<16xf32> to vector<16x1xf32>
    %28 = tpu.reciprocal %27 {approx = true} : vector<16x1xf32> -> vector<16x1xf32>
    %29 = vector.broadcast %28 : vector<16x1xf32> to vector<16x16xf32>
    %30 = arith.mulf %25, %29 : vector<16x16xf32>
    %31 = vector.extract_strided_slice %4 {offsets = [0, 0], sizes = [16, 32], strides = [1, 1]} : vector<16x128xf32> to vector<16x32xf32>
    %cst_18 = arith.constant dense<0.000000e+00> : vector<16x32xf32>
    %32 = tpu.matmul %30, %31, %cst_18 {dimension_numbers = #tpu.dot_dimension_numbers<[1], [0], [0], [1], [0, 0, 1, 1], [], []>} : vector<16x16xf32>, vector<16x32xf32>, vector<16x32xf32> -> vector<16x32xf32>
    %33 = arith.addf %9, %32 : vector<16x32xf32>
    %34 = vector.extract_strided_slice %6 {offsets = [0, 1], sizes = [16, 1], strides = [1, 1]} : vector<16x4xf32> to vector<16x1xf32>
    %35 = vector.extract_strided_slice %8 {offsets = [1, 0], sizes = [1, 16], strides = [1, 1]} : vector<4x16xf32> to vector<1x16xf32>
    %36 = vector.broadcast %34 : vector<16x1xf32> to vector<16x16xf32>
    %37 = vector.broadcast %35 : vector<1x16xf32> to vector<16x16xf32>
    %38 = arith.addf %36, %37 : vector<16x16xf32>
    %cst_19 = arith.constant 0.000000e+00 : f32
    %39 = vector.broadcast %cst_19 : f32 to vector<16x16xf32>
    %40 = arith.cmpf oge, %38, %39 : vector<16x16xf32>
    %cst_20 = arith.constant 2.000000e-01 : f32
    %41 = vector.broadcast %cst_20 : f32 to vector<16x16xf32>
    %42 = arith.mulf %41, %38 : vector<16x16xf32>
    %43 = arith.select %40, %38, %42 : vector<16x16xi1>, vector<16x16xf32>
    %44 = arith.addf %43, %2 : vector<16x16xf32>
    %cst_21 = arith.constant dense<0xFF800000> : vector<16xf32>
    %45 = vector.multi_reduction <maximumf>, %44, %cst_21 [1] : vector<16x16xf32> to vector<16xf32>
    %46 = vector.shape_cast %45 : vector<16xf32> to vector<16x1xf32>
    %47 = vector.broadcast %46 : vector<16x1xf32> to vector<16x16xf32>
    %48 = arith.subf %44, %47 : vector<16x16xf32>
    %49 = math.exp %48 : vector<16x16xf32>
    %cst_22 = arith.constant dense<0.000000e+00> : vector<16xf32>
    %50 = vector.multi_reduction <add>, %49, %cst_22 [1] : vector<16x16xf32> to vector<16xf32>
    %51 = vector.shape_cast %50 : vector<16xf32> to vector<16x1xf32>
    %52 = tpu.reciprocal %51 {approx = true} : vector<16x1xf32> -> vector<16x1xf32>
    %53 = vector.broadcast %52 : vector<16x1xf32> to vector<16x16xf32>
    %54 = arith.mulf %49, %53 : vector<16x16xf32>
    %55 = vector.extract_strided_slice %4 {offsets = [0, 32], sizes = [16, 32], strides = [1, 1]} : vector<16x128xf32> to vector<16x32xf32>
    %cst_23 = arith.constant dense<0.000000e+00> : vector<16x32xf32>
    %56 = tpu.matmul %54, %55, %cst_23 {dimension_numbers = #tpu.dot_dimension_numbers<[1], [0], [0], [1], [0, 0, 1, 1], [], []>} : vector<16x16xf32>, vector<16x32xf32>, vector<16x32xf32> -> vector<16x32xf32>
    %57 = arith.addf %33, %56 : vector<16x32xf32>
    %58 = vector.extract_strided_slice %6 {offsets = [0, 2], sizes = [16, 1], strides = [1, 1]} : vector<16x4xf32> to vector<16x1xf32>
    %59 = vector.extract_strided_slice %8 {offsets = [2, 0], sizes = [1, 16], strides = [1, 1]} : vector<4x16xf32> to vector<1x16xf32>
    %60 = vector.broadcast %58 : vector<16x1xf32> to vector<16x16xf32>
    %61 = vector.broadcast %59 : vector<1x16xf32> to vector<16x16xf32>
    %62 = arith.addf %60, %61 : vector<16x16xf32>
    %cst_24 = arith.constant 0.000000e+00 : f32
    %63 = vector.broadcast %cst_24 : f32 to vector<16x16xf32>
    %64 = arith.cmpf oge, %62, %63 : vector<16x16xf32>
    %cst_25 = arith.constant 2.000000e-01 : f32
    %65 = vector.broadcast %cst_25 : f32 to vector<16x16xf32>
    %66 = arith.mulf %65, %62 : vector<16x16xf32>
    %67 = arith.select %64, %62, %66 : vector<16x16xi1>, vector<16x16xf32>
    %68 = arith.addf %67, %2 : vector<16x16xf32>
    %cst_26 = arith.constant dense<0xFF800000> : vector<16xf32>
    %69 = vector.multi_reduction <maximumf>, %68, %cst_26 [1] : vector<16x16xf32> to vector<16xf32>
    %70 = vector.shape_cast %69 : vector<16xf32> to vector<16x1xf32>
    %71 = vector.broadcast %70 : vector<16x1xf32> to vector<16x16xf32>
    %72 = arith.subf %68, %71 : vector<16x16xf32>
    %73 = math.exp %72 : vector<16x16xf32>
    %cst_27 = arith.constant dense<0.000000e+00> : vector<16xf32>
    %74 = vector.multi_reduction <add>, %73, %cst_27 [1] : vector<16x16xf32> to vector<16xf32>
    %75 = vector.shape_cast %74 : vector<16xf32> to vector<16x1xf32>
    %76 = tpu.reciprocal %75 {approx = true} : vector<16x1xf32> -> vector<16x1xf32>
    %77 = vector.broadcast %76 : vector<16x1xf32> to vector<16x16xf32>
    %78 = arith.mulf %73, %77 : vector<16x16xf32>
    %79 = vector.extract_strided_slice %4 {offsets = [0, 64], sizes = [16, 32], strides = [1, 1]} : vector<16x128xf32> to vector<16x32xf32>
    %cst_28 = arith.constant dense<0.000000e+00> : vector<16x32xf32>
    %80 = tpu.matmul %78, %79, %cst_28 {dimension_numbers = #tpu.dot_dimension_numbers<[1], [0], [0], [1], [0, 0, 1, 1], [], []>} : vector<16x16xf32>, vector<16x32xf32>, vector<16x32xf32> -> vector<16x32xf32>
    %81 = arith.addf %57, %80 : vector<16x32xf32>
    %82 = vector.extract_strided_slice %6 {offsets = [0, 3], sizes = [16, 1], strides = [1, 1]} : vector<16x4xf32> to vector<16x1xf32>
    %83 = vector.extract_strided_slice %8 {offsets = [3, 0], sizes = [1, 16], strides = [1, 1]} : vector<4x16xf32> to vector<1x16xf32>
    %84 = vector.broadcast %82 : vector<16x1xf32> to vector<16x16xf32>
    %85 = vector.broadcast %83 : vector<1x16xf32> to vector<16x16xf32>
    %86 = arith.addf %84, %85 : vector<16x16xf32>
    %cst_29 = arith.constant 0.000000e+00 : f32
    %87 = vector.broadcast %cst_29 : f32 to vector<16x16xf32>
    %88 = arith.cmpf oge, %86, %87 : vector<16x16xf32>
    %cst_30 = arith.constant 2.000000e-01 : f32
    %89 = vector.broadcast %cst_30 : f32 to vector<16x16xf32>
    %90 = arith.mulf %89, %86 : vector<16x16xf32>
    %91 = arith.select %88, %86, %90 : vector<16x16xi1>, vector<16x16xf32>
    %92 = arith.addf %91, %2 : vector<16x16xf32>
    %cst_31 = arith.constant dense<0xFF800000> : vector<16xf32>
    %93 = vector.multi_reduction <maximumf>, %92, %cst_31 [1] : vector<16x16xf32> to vector<16xf32>
    %94 = vector.shape_cast %93 : vector<16xf32> to vector<16x1xf32>
    %95 = vector.broadcast %94 : vector<16x1xf32> to vector<16x16xf32>
    %96 = arith.subf %92, %95 : vector<16x16xf32>
    %97 = math.exp %96 : vector<16x16xf32>
    %cst_32 = arith.constant dense<0.000000e+00> : vector<16xf32>
    %98 = vector.multi_reduction <add>, %97, %cst_32 [1] : vector<16x16xf32> to vector<16xf32>
    %99 = vector.shape_cast %98 : vector<16xf32> to vector<16x1xf32>
    %100 = tpu.reciprocal %99 {approx = true} : vector<16x1xf32> -> vector<16x1xf32>
    %101 = vector.broadcast %100 : vector<16x1xf32> to vector<16x16xf32>
    %102 = arith.mulf %97, %101 : vector<16x16xf32>
    %103 = vector.extract_strided_slice %4 {offsets = [0, 96], sizes = [16, 32], strides = [1, 1]} : vector<16x128xf32> to vector<16x32xf32>
    %cst_33 = arith.constant dense<0.000000e+00> : vector<16x32xf32>
    %104 = tpu.matmul %102, %103, %cst_33 {dimension_numbers = #tpu.dot_dimension_numbers<[1], [0], [0], [1], [0, 0, 1, 1], [], []>} : vector<16x16xf32>, vector<16x32xf32>, vector<16x32xf32> -> vector<16x32xf32>
    %105 = arith.addf %81, %104 : vector<16x32xf32>
    %cst_34 = arith.constant 2.500000e-01 : f32
    %106 = vector.broadcast %cst_34 : f32 to vector<16x32xf32>
    %107 = arith.mulf %105, %106 : vector<16x32xf32>
    %cst_35 = arith.constant 0.000000e+00 : f32
    %108 = vector.broadcast %cst_35 : f32 to vector<16x32xf32>
    %109 = arith.cmpf ogt, %107, %108 : vector<16x32xf32>
    %cst_36 = arith.constant 0.000000e+00 : f32
    %110 = vector.broadcast %cst_36 : f32 to vector<16x32xf32>
    %111 = arith.minimumf %107, %110 : vector<16x32xf32>
    %112 = math.exp %111 : vector<16x32xf32>
    %cst_37 = arith.constant 1.000000e+00 : f32
    %113 = vector.broadcast %cst_37 : f32 to vector<16x32xf32>
    %114 = arith.subf %112, %113 : vector<16x32xf32>
    %115 = arith.select %109, %107, %114 : vector<16x32xi1>, vector<16x32xf32>
    %c0_38 = arith.constant 0 : index
    %c0_39 = arith.constant 0 : index
    %116 = vector.load %arg7[%c0_38, %c0_39] : memref<32x128xf32, #tpu.memory_space<vmem>>, vector<32x128xf32>
    %cst_40 = arith.constant dense<0.000000e+00> : vector<16x128xf32>
    %117 = tpu.matmul %115, %116, %cst_40 {dimension_numbers = #tpu.dot_dimension_numbers<[1], [0], [0], [1], [0, 0, 1, 1], [], []>} : vector<16x32xf32>, vector<32x128xf32>, vector<16x128xf32> -> vector<16x128xf32>
    %c0_41 = arith.constant 0 : index
    %c0_42 = arith.constant 0 : index
    %118 = vector.load %arg8[%c0_41, %c0_42] : memref<32x1xf32, #tpu.memory_space<vmem>>, vector<32x1xf32>
    %cst_43 = arith.constant dense<0.000000e+00> : vector<16x1xf32>
    %119 = tpu.matmul %115, %118, %cst_43 {dimension_numbers = #tpu.dot_dimension_numbers<[1], [0], [0], [1], [0, 0, 1, 1], [], []>} : vector<16x32xf32>, vector<32x1xf32>, vector<16x1xf32> -> vector<16x1xf32>
    %c0_44 = arith.constant 0 : index
    %c0_45 = arith.constant 0 : index
    %120 = vector.load %arg9[%c0_44, %c0_45] : memref<32x1xf32, #tpu.memory_space<vmem>>, vector<32x1xf32>
    %cst_46 = arith.constant dense<0.000000e+00> : vector<16x1xf32>
    %121 = tpu.matmul %115, %120, %cst_46 {dimension_numbers = #tpu.dot_dimension_numbers<[1], [0], [0], [1], [0, 0, 1, 1], [], []>} : vector<16x32xf32>, vector<32x1xf32>, vector<16x1xf32> -> vector<16x1xf32>
    %122 = tpu.transpose %121, [1, 0] : vector<16x1xf32> -> vector<1x16xf32>
    %123 = vector.broadcast %119 : vector<16x1xf32> to vector<16x16xf32>
    %124 = vector.broadcast %122 : vector<1x16xf32> to vector<16x16xf32>
    %125 = arith.addf %123, %124 : vector<16x16xf32>
    %cst_47 = arith.constant 0.000000e+00 : f32
    %126 = vector.broadcast %cst_47 : f32 to vector<16x16xf32>
    %127 = arith.cmpf oge, %125, %126 : vector<16x16xf32>
    %cst_48 = arith.constant 2.000000e-01 : f32
    %128 = vector.broadcast %cst_48 : f32 to vector<16x16xf32>
    %129 = arith.mulf %128, %125 : vector<16x16xf32>
    %130 = arith.select %127, %125, %129 : vector<16x16xi1>, vector<16x16xf32>
    %131 = arith.addf %130, %2 : vector<16x16xf32>
    %cst_49 = arith.constant dense<0xFF800000> : vector<16xf32>
    %132 = vector.multi_reduction <maximumf>, %131, %cst_49 [1] : vector<16x16xf32> to vector<16xf32>
    %133 = vector.shape_cast %132 : vector<16xf32> to vector<16x1xf32>
    %134 = vector.broadcast %133 : vector<16x1xf32> to vector<16x16xf32>
    %135 = arith.subf %131, %134 : vector<16x16xf32>
    %136 = math.exp %135 : vector<16x16xf32>
    %cst_50 = arith.constant dense<0.000000e+00> : vector<16xf32>
    %137 = vector.multi_reduction <add>, %136, %cst_50 [1] : vector<16x16xf32> to vector<16xf32>
    %138 = vector.shape_cast %137 : vector<16xf32> to vector<16x1xf32>
    %139 = tpu.reciprocal %138 {approx = true} : vector<16x1xf32> -> vector<16x1xf32>
    %140 = vector.broadcast %139 : vector<16x1xf32> to vector<16x16xf32>
    %141 = arith.mulf %136, %140 : vector<16x16xf32>
    %cst_51 = arith.constant dense<0.000000e+00> : vector<16x128xf32>
    %142 = tpu.matmul %141, %117, %cst_51 {dimension_numbers = #tpu.dot_dimension_numbers<[1], [0], [0], [1], [0, 0, 1, 1], [], []>} : vector<16x16xf32>, vector<16x128xf32>, vector<16x128xf32> -> vector<16x128xf32>
    %c0_52 = arith.constant 0 : index
    %c0_53 = arith.constant 0 : index
    %143 = vector.load %arg10[%c0_52, %c0_53] : memref<16x128xf32, #tpu.memory_space<vmem>>, vector<16x128xf32>
    tpu.vector_store %arg10[%c0_52, %c0_53], %142 {strides = array<i32>} : memref<16x128xf32, #tpu.memory_space<vmem>>, vector<16x128xf32>,
    return
  }
  func.func @transform_0(%arg0: i32) -> (i32, i32) {
    %c0_i32 = arith.constant 0 : i32
    %c0_i32_0 = arith.constant 0 : i32
    %c0_i32_1 = arith.constant 0 : i32
    return %c0_i32, %c0_i32_0 : i32, i32
  }
  func.func @transform_1(%arg0: i32) -> (i32, i32) {
    %c0_i32 = arith.constant 0 : i32
    %c0_i32_0 = arith.constant 0 : i32
    %c0_i32_1 = arith.constant 0 : i32
    return %c0_i32, %c0_i32_0 : i32, i32
  }
  func.func @transform_2(%arg0: i32) -> (i32, i32) {
    %c0_i32 = arith.constant 0 : i32
    %c0_i32_0 = arith.constant 0 : i32
    %c0_i32_1 = arith.constant 0 : i32
    return %c0_i32, %c0_i32_0 : i32, i32
  }
  func.func @transform_3(%arg0: i32) -> (i32, i32) {
    %c0_i32 = arith.constant 0 : i32
    %c0_i32_0 = arith.constant 0 : i32
    %c0_i32_1 = arith.constant 0 : i32
    return %c0_i32, %c0_i32_0 : i32, i32
  }
  func.func @transform_4(%arg0: i32) -> (i32, i32) {
    %c0_i32 = arith.constant 0 : i32
    %c0_i32_0 = arith.constant 0 : i32
    %c0_i32_1 = arith.constant 0 : i32
    return %c0_i32, %c0_i32_0 : i32, i32
  }
  func.func @transform_5(%arg0: i32) -> (i32, i32) {
    %c0_i32 = arith.constant 0 : i32
    %c0_i32_0 = arith.constant 0 : i32
    %c0_i32_1 = arith.constant 0 : i32
    return %c0_i32, %c0_i32_0 : i32, i32
  }
  func.func @transform_6(%arg0: i32) -> (i32, i32) {
    %c0_i32 = arith.constant 0 : i32
    %c0_i32_0 = arith.constant 0 : i32
    %c0_i32_1 = arith.constant 0 : i32
    return %c0_i32, %c0_i32_0 : i32, i32
  }
  func.func @transform_7(%arg0: i32) -> (i32, i32) {
    %c0_i32 = arith.constant 0 : i32
    %c0_i32_0 = arith.constant 0 : i32
    %c0_i32_1 = arith.constant 0 : i32
    return %c0_i32, %c0_i32_0 : i32, i32
  }
  func.func @transform_8(%arg0: i32) -> (i32, i32) {
    %c0_i32 = arith.constant 0 : i32
    %c0_i32_0 = arith.constant 0 : i32
    %c0_i32_1 = arith.constant 0 : i32
    return %c0_i32, %c0_i32_0 : i32, i32
  }
  func.func @transform_9(%arg0: i32) -> (i32, i32) {
    %c0_i32 = arith.constant 0 : i32
    %c0_i32_0 = arith.constant 0 : i32
    %c0_i32_1 = arith.constant 0 : i32
    return %c0_i32, %c0_i32_0 : i32, i32
  }
}

</mosaic_0001>

<llo_original>
// kernel: gat_forward.1
$region0: #{gat_forward.1}
  #allocation0 [shape = 'u32[]', space=smem, size = 0x4, offset = 0x4, fixed_abs, tag = 'smem constant byte address 0x4 - core index']
  #allocation1 [shape = 'u32[144,128]{1,0:T(1,128)}', space=vmem, size = 0x12000, scoped, tag = 'internal scratch']
  %s0 = inlined_call_operand.vmem [shape: f32[16,8], index: 0, kind: input, shape index: {}]
  %s1 = inlined_call_operand.vmem [shape: f32[8,16], index: 1, kind: input, shape index: {}]
  %s2 = inlined_call_operand.vmem [shape: f32[8,128], index: 2, kind: input, shape index: {}]
  %s3 = inlined_call_operand.vmem [shape: f32[8,4], index: 3, kind: input, shape index: {}]
  %s4 = inlined_call_operand.vmem [shape: f32[4,8], index: 4, kind: input, shape index: {}]
  %s5 = inlined_call_operand.vmem [shape: f32[16,16], index: 5, kind: input, shape index: {}]
  %s6 = inlined_call_operand.vmem [shape: f32[32,128], index: 6, kind: input, shape index: {}]
  %s7 = inlined_call_operand.vmem [shape: f32[32,1], index: 7, kind: input, shape index: {}]
  %s8 = inlined_call_operand.vmem [shape: f32[32,1], index: 8, kind: input, shape index: {}]
  %s9 = inlined_call_operand.vmem [shape: f32[16,128], index: 9, kind: output, shape index: {}]
  %s10 = sld [smem:[#allocation0]]
  $region46: #{gat_forward.1} parent=0
    _
  %s12 = ssub.s32 1, %s10
  %s13 = scalar_select 0, %s12, %s10
  // Predicated region
  $region2: #{gat_forward.1} parent=0 // pred_check
    _
  $region3: #{gat_forward.1} parent=0 // pred_check_branch
    %15 = sbr.rel (0) target = $region5
  $region4: #{gat_forward.1} parent=0 // pred_region
    _
  $region5: #{gat_forward.1} parent=0 // pred_fallthru
    _
  // Predicated region
  $region6: #{gat_forward.1} parent=0 // pred_check
    _
  $region7: #{gat_forward.1} parent=0 // pred_check_branch
    %17 = sbr.rel (0) target = $region9
  $region8: #{gat_forward.1} parent=0 // pred_region
    _
  $region9: #{gat_forward.1} parent=0 // pred_fallthru
    _
  // Predicated region
  $region10: #{gat_forward.1} parent=0 // pred_check
    _
  $region11: #{gat_forward.1} parent=0 // pred_check_branch
    %19 = sbr.rel (0) target = $region13
  $region12: #{gat_forward.1} parent=0 // pred_region
    _
  $region13: #{gat_forward.1} parent=0 // pred_fallthru
    _
  // Predicated region
  $region14: #{gat_forward.1} parent=0 // pred_check
    _
  $region15: #{gat_forward.1} parent=0 // pred_check_branch
    %21 = sbr.rel (0) target = $region17
  $region16: #{gat_forward.1} parent=0 // pred_region
    _
  $region17: #{gat_forward.1} parent=0 // pred_fallthru
    _
  // Predicated region
  $region18: #{gat_forward.1} parent=0 // pred_check
    _
  $region19: #{gat_forward.1} parent=0 // pred_check_branch
    %23 = sbr.rel (0) target = $region21
  $region20: #{gat_forward.1} parent=0 // pred_region
    _
  $region21: #{gat_forward.1} parent=0 // pred_fallthru
    _
  // Predicated region
  $region22: #{gat_forward.1} parent=0 // pred_check
    _
  $region23: #{gat_forward.1} parent=0 // pred_check_branch
    %25 = sbr.rel (0) target = $region25
  $region24: #{gat_forward.1} parent=0 // pred_region
    _
  $region25: #{gat_forward.1} parent=0 // pred_fallthru
    _
  // Predicated region
  $region26: #{gat_forward.1} parent=0 // pred_check
    _
  $region27: #{gat_forward.1} parent=0 // pred_check_branch
    %27 = sbr.rel (0) target = $region29
  $region28: #{gat_forward.1} parent=0 // pred_region
    _
  $region29: #{gat_forward.1} parent=0 // pred_fallthru
    _
  // Predicated region
  $region30: #{gat_forward.1} parent=0 // pred_check
    _
  $region31: #{gat_forward.1} parent=0 // pred_check_branch
    %29 = sbr.rel (0) target = $region33
  $region32: #{gat_forward.1} parent=0 // pred_region
    _
  $region33: #{gat_forward.1} parent=0 // pred_fallthru
    _
  // Predicated region
  $region34: #{gat_forward.1} parent=0 // pred_check
    _
  $region35: #{gat_forward.1} parent=0 // pred_check_branch
    %31 = sbr.rel (0) target = $region37
  $region36: #{gat_forward.1} parent=0 // pred_region
    _
  $region37: #{gat_forward.1} parent=0 // pred_fallthru
    _
  %v32 = vld [vmem:[%s0] sm:$0xff]
  %v33 = vld [vmem:[%s0 + $0x8] sm:$0xff]
  %v34 = vld [vmem:[%s1] sm:$0xff]
  %v35 = vld [vmem:[%s5] sm:$0xff]
  %v36 = vld [vmem:[%s5 + $0x8] sm:$0xff]
  %v37 = vld [vmem:[%s2] sm:$0xff]
  %vm38 = vcmask 64512
  %v40 = vsel %vm38, %v32, 0
  %v43 = vsel %vm38, %v33, 0
  %45 = vmatprep.subr.mxu0 0.0
  %46 = vmatpush1.msra.mxu0 %v37
  %47 = vmatprep.subr.mxu0 0.0
  %48 = vmatpush1.msra.mxu0 0.0
  %49 = vmatprep.subr.mxu0 0.0
  %50 = vmatpush1.msra.mxu0 0.0
  %51 = vmatprep.subr.mxu0 0.0
  %52 = vmatpush1.msra.mxu0 0.0
  %53 = vmatprep.subr.mxu0 0.0
  %54 = vmatpush1.msra.mxu0 0.0
  %55 = vmatprep.subr.mxu0 0.0
  %56 = vmatpush1.msra.mxu0 0.0
  %57 = vmatprep.subr.mxu0 0.0
  %58 = vmatpush1.msra.mxu0 0.0
  %59 = vmatprep.subr.mxu0 0.0
  %60 = vmatpush1.msra.mxu0 0.0
  %61 = vmatprep.subr.mxu0 0.0
  %62 = vmatpush1.msra.mxu0 0.0
  %63 = vmatprep.subr.mxu0 0.0
  %64 = vmatpush1.msra.mxu0 0.0
  %65 = vmatprep.subr.mxu0 0.0
  %66 = vmatpush1.msra.mxu0 0.0
  %67 = vmatprep.subr.mxu0 0.0
  %68 = vmatpush1.msra.mxu0 0.0
  %69 = vmatprep.subr.mxu0 0.0
  %70 = vmatpush1.msra.mxu0 0.0
  %71 = vmatprep.subr.mxu0 0.0
  %72 = vmatpush1.msra.mxu0 0.0
  %73 = vmatprep.subr.mxu0 0.0
  %74 = vmatpush1.msra.mxu0 0.0
  %75 = vmatprep.subr.mxu0 0.0
  %76 = vmatpush1.msra.mxu0 0.0
  %77 = vmatprep.subr.mxu0 0.0
  %78 = vmatpush1.msra.mxu0 0.0
  %79 = vmatprep.subr.mxu0 0.0
  %80 = vmatpush1.msra.mxu0 0.0
  %81 = vmatprep.subr.mxu0 0.0
  %82 = vmatpush1.msra.mxu0 0.0
  %83 = vmatprep.subr.mxu0 0.0
  %84 = vmatpush1.msra.mxu0 0.0
  %85 = vmatprep.subr.mxu0 0.0
  %86 = vmatpush1.msra.mxu0 0.0
  %87 = vmatprep.subr.mxu0 0.0
  %88 = vmatpush1.msra.mxu0 0.0
  %89 = vmatprep.subr.mxu0 0.0
  %90 = vmatpush1.msra.mxu0 0.0
  %91 = vmatprep.subr.mxu0 0.0
  %92 = vmatpush1.msra.mxu0 0.0
  %93 = vmatprep.subr.mxu0 0.0
  %94 = vmatpush1.msra.mxu0 0.0
  %95 = vmatprep.subr.mxu0 0.0
  %96 = vmatpush1.msra.mxu0 0.0
  %97 = vmatprep.subr.mxu0 0.0
  %98 = vmatpush1.msra.mxu0 0.0
  %99 = vmatprep.subr.mxu0 0.0
  %100 = vmatpush1.msra.mxu0 0.0
  %101 = vmatprep.subr.mxu0 0.0
  %102 = vmatpush1.msra.mxu0 0.0
  %103 = vmatprep.subr.mxu0 0.0
  %104 = vmatpush1.msra.mxu0 0.0
  %105 = vmatprep.subr.mxu0 0.0
  %106 = vmatpush1.msra.mxu0 0.0
  %107 = vmatprep.subr.mxu0 0.0
  %108 = vmatpush1.msra.mxu0 0.0
  %109 = vmatprep.mubr.f32.mxu0 0.0
  %110 = vmatmul.mubr.f32.gmra.mrb[0].mxu0 %v40
  %v111 = vpop.f32.mrb[0].mxu0
  %v112 = vadd.f32 0.0, %v111
  %v113 = vpop.f32.mrb[0].mxu0
  %114 = vmatprep.mubr.f32.mxu0 0.0
  %115 = vmatmul.mubr.f32.gmra.mrb[0].mxu0 %v43
  %v116 = vpop.f32.mrb[0].mxu0
  %v117 = vadd.f32 0.0, %v116
  %v118 = vpop.f32.mrb[0].mxu0
  %119 = vdwg.mxu0
  %v120 = vld [vmem:[%s3] sm:$0xff]
  %121 = vmatprep.subr.mxu0 0.0
  %122 = vmatpush1.msra.mxu0 %v120
  %123 = vmatprep.subr.mxu0 0.0
  %124 = vmatpush1.msra.mxu0 0.0
  %125 = vmatprep.subr.mxu0 0.0
  %126 = vmatpush1.msra.mxu0 0.0
  %127 = vmatprep.subr.mxu0 0.0
  %128 = vmatpush1.msra.mxu0 0.0
  %129 = vmatprep.subr.mxu0 0.0
  %130 = vmatpush1.msra.mxu0 0.0
  %131 = vmatprep.subr.mxu0 0.0
  %132 = vmatpush1.msra.mxu0 0.0
  %133 = vmatprep.subr.mxu0 0.0
  %134 = vmatpush1.msra.mxu0 0.0
  %135 = vmatprep.subr.mxu0 0.0
  %136 = vmatpush1.msra.mxu0 0.0
  %137 = vmatprep.subr.mxu0 0.0
  %138 = vmatpush1.msra.mxu0 0.0
  %139 = vmatprep.subr.mxu0 0.0
  %140 = vmatpush1.msra.mxu0 0.0
  %141 = vmatprep.subr.mxu0 0.0
  %142 = vmatpush1.msra.mxu0 0.0
  %143 = vmatprep.subr.mxu0 0.0
  %144 = vmatpush1.msra.mxu0 0.0
  %145 = vmatprep.subr.mxu0 0.0
  %146 = vmatpush1.msra.mxu0 0.0
  %147 = vmatprep.subr.mxu0 0.0
  %148 = vmatpush1.msra.mxu0 0.0
  %149 = vmatprep.subr.mxu0 0.0
  %150 = vmatpush1.msra.mxu0 0.0
  %151 = vmatprep.subr.mxu0 0.0
  %152 = vmatpush1.msra.mxu0 0.0
  %153 = vmatprep.subr.mxu0 0.0
  %154 = vmatpush1.msra.mxu0 0.0
  %155 = vmatprep.subr.mxu0 0.0
  %156 = vmatpush1.msra.mxu0 0.0
  %157 = vmatprep.subr.mxu0 0.0
  %158 = vmatpush1.msra.mxu0 0.0
  %159 = vmatprep.subr.mxu0 0.0
  %160 = vmatpush1.msra.mxu0 0.0
  %161 = vmatprep.subr.mxu0 0.0
  %162 = vmatpush1.msra.mxu0 0.0
  %163 = vmatprep.subr.mxu0 0.0
  %164 = vmatpush1.msra.mxu0 0.0
  %165 = vmatprep.subr.mxu0 0.0
  %166 = vmatpush1.msra.mxu0 0.0
  %167 = vmatprep.subr.mxu0 0.0
  %168 = vmatpush1.msra.mxu0 0.0
  %169 = vmatprep.subr.mxu0 0.0
  %170 = vmatpush1.msra.mxu0 0.0
  %171 = vmatprep.subr.mxu0 0.0
  %172 = vmatpush1.msra.mxu0 0.0
  %173 = vmatprep.subr.mxu0 0.0
  %174 = vmatpush1.msra.mxu0 0.0
  %175 = vmatprep.subr.mxu0 0.0
  %176 = vmatpush1.msra.mxu0 0.0
  %177 = vmatprep.subr.mxu0 0.0
  %178 = vmatpush1.msra.mxu0 0.0
  %179 = vmatprep.subr.mxu0 0.0
  %180 = vmatpush1.msra.mxu0 0.0
  %181 = vmatprep.subr.mxu0 0.0
  %182 = vmatpush1.msra.mxu0 0.0
  %183 = vmatprep.subr.mxu0 0.0
  %184 = vmatpush1.msra.mxu0 0.0
  %185 = vmatprep.mubr.f32.mxu0 0.0
  %186 = vmatmul.mubr.f32.gmra.mrb[0].mxu0 %v40
  %v187 = vpop.f32.mrb[0].mxu0
  %v188 = vadd.f32 0.0, %v187
  %v189 = vpop.f32.mrb[0].mxu0
  %190 = vmatprep.mubr.f32.mxu0 0.0
  %191 = vmatmul.mubr.f32.gmra.mrb[0].mxu0 %v43
  %v192 = vpop.f32.mrb[0].mxu0
  %v193 = vadd.f32 0.0, %v192
  %v194 = vpop.f32.mrb[0].mxu0
  %195 = vdwg.mxu0
  %v196 = vld [vmem:[%s4] sm:$0xf]
  %v198 = vsel %vm38, %v196, 0
  %200 = vmatprep.subr.mxu0 0.0
  %201 = vmatpush1.msra.mxu0 %v34
  %202 = vmatprep.subr.mxu0 0.0
  %203 = vmatpush1.msra.mxu0 0.0
  %204 = vmatprep.subr.mxu0 0.0
  %205 = vmatpush1.msra.mxu0 0.0
  %206 = vmatprep.subr.mxu0 0.0
  %207 = vmatpush1.msra.mxu0 0.0
  %208 = vmatprep.subr.mxu0 0.0
  %209 = vmatpush1.msra.mxu0 0.0
  %210 = vmatprep.subr.mxu0 0.0
  %211 = vmatpush1.msra.mxu0 0.0
  %212 = vmatprep.subr.mxu0 0.0
  %213 = vmatpush1.msra.mxu0 0.0
  %214 = vmatprep.subr.mxu0 0.0
  %215 = vmatpush1.msra.mxu0 0.0
  %216 = vmatprep.subr.mxu0 0.0
  %217 = vmatpush1.msra.mxu0 0.0
  %218 = vmatprep.subr.mxu0 0.0
  %219 = vmatpush1.msra.mxu0 0.0
  %220 = vmatprep.subr.mxu0 0.0
  %221 = vmatpush1.msra.mxu0 0.0
  %222 = vmatprep.subr.mxu0 0.0
  %223 = vmatpush1.msra.mxu0 0.0
  %224 = vmatprep.subr.mxu0 0.0
  %225 = vmatpush1.msra.mxu0 0.0
  %226 = vmatprep.subr.mxu0 0.0
  %227 = vmatpush1.msra.mxu0 0.0
  %228 = vmatprep.subr.mxu0 0.0
  %229 = vmatpush1.msra.mxu0 0.0
  %230 = vmatprep.subr.mxu0 0.0
  %231 = vmatpush1.msra.mxu0 0.0
  %232 = vmatprep.subr.mxu0 0.0
  %233 = vmatpush1.msra.mxu0 0.0
  %234 = vmatprep.subr.mxu0 0.0
  %235 = vmatpush1.msra.mxu0 0.0
  %236 = vmatprep.subr.mxu0 0.0
  %237 = vmatpush1.msra.mxu0 0.0
  %238 = vmatprep.subr.mxu0 0.0
  %239 = vmatpush1.msra.mxu0 0.0
  %240 = vmatprep.subr.mxu0 0.0
  %241 = vmatpush1.msra.mxu0 0.0
  %242 = vmatprep.subr.mxu0 0.0
  %243 = vmatpush1.msra.mxu0 0.0
  %244 = vmatprep.subr.mxu0 0.0
  %245 = vmatpush1.msra.mxu0 0.0
  %246 = vmatprep.subr.mxu0 0.0
  %247 = vmatpush1.msra.mxu0 0.0
  %248 = vmatprep.subr.mxu0 0.0
  %249 = vmatpush1.msra.mxu0 0.0
  %250 = vmatprep.subr.mxu0 0.0
  %251 = vmatpush1.msra.mxu0 0.0
  %252 = vmatprep.subr.mxu0 0.0
  %253 = vmatpush1.msra.mxu0 0.0
  %254 = vmatprep.subr.mxu0 0.0
  %255 = vmatpush1.msra.mxu0 0.0
  %256 = vmatprep.subr.mxu0 0.0
  %257 = vmatpush1.msra.mxu0 0.0
  %258 = vmatprep.subr.mxu0 0.0
  %259 = vmatpush1.msra.mxu0 0.0
  %260 = vmatprep.subr.mxu0 0.0
  %261 = vmatpush1.msra.mxu0 0.0
  %262 = vmatprep.subr.mxu0 0.0
  %263 = vmatpush1.msra.mxu0 0.0
  %264 = vmatprep.mubr.f32.mxu0 0.0
  %265 = vmatmul.mubr.f32.gmra.mrb[0].mxu0 %v198
  %v266 = vpop.f32.mrb[0].mxu0
  %v267 = vadd.f32 0.0, %v266
  %v268 = vpop.f32.mrb[0].mxu0
  %269 = vdwg.mxu0
  %271 = vset.pattern.permute.xlu0 0
  %272 = vperm.xlu0 %271, %v188
  %v273 = vpop.permute.xlu0 %272
  %276 = vset.pattern.permute.xlu0 0
  %277 = vperm.xlu0 %276, %v193
  %v278 = vpop.permute.xlu0 %277
  %v280 = vlaneseq
  %v281 = vshrl.u32 %v280, 7
  %v282 = vsub.s32 0, %v281
  %v283 = vrot.slane %v267, %v282
  %v284 = vadd.f32 %v273, %v283
  %v285 = vadd.f32 %v278, %v283
  %vm286 = vcmp.ge.f32.partialorder %v284, 0.0
  %vm287 = vcmp.ge.f32.partialorder %v285, 0.0
  %v288 = vmul.f32 %v284, 0.2
  %v289 = vmul.f32 %v285, 0.2
  %v290 = vsel %vm286, %v284, %v288
  %v291 = vsel %vm287, %v285, %v289
  %v292 = vadd.f32 %v290, %v35
  %v293 = vadd.f32 %v291, %v36
  %vm294 = vcmask 130048
  %v295 = vsel %vm294, %v292, -inf
  %296 = vmax.xlane.f32.xlu0 %v295
  %v297 = vpop.xlane.xlu0 %296
  %v298 = vsel %vm294, %v293, -inf
  %299 = vmax.xlane.f32.xlu0 %v298
  %v300 = vpop.xlane.xlu0 %299
  %v301 = vsub.f32 %v292, %v297
  %v302 = vsub.f32 %v293, %v300
  %v303 = vmul.f32 %v301, 1.442695
  %v304 = vpow.pop %v303
  %v305 = vmul.f32 %v302, 1.442695
  %v306 = vpow.pop %v305
  %v307 = vsel %vm294, %v304, 0.0
  %308 = vadd.xlane.f32.xlu0 %v307
  %v309 = vpop.xlane.xlu0 %308
  %v310 = vsel %vm294, %v306, 0.0
  %311 = vadd.xlane.f32.xlu0 %v310
  %v312 = vpop.xlane.xlu0 %311
  %v313 = vrcp.pop %v309
  %v314 = vrcp.pop %v312
  %v315 = vmul.f32 %v304, %v313
  %v316 = vmul.f32 %v306, %v314
  %317 = vset.pattern.permute.xlu0 1
  %318 = vperm.xlu0 %317, %v188
  %v319 = vpop.permute.xlu0 %318
  %321 = vset.pattern.permute.xlu0 1
  %322 = vperm.xlu0 %321, %v193
  %v323 = vpop.permute.xlu0 %322
  %v325 = vlaneseq
  %v326 = vshrl.u32 %v325, 7
  %v327 = vsub.s32 1, %v326
  %v328 = vrot.slane %v267, %v327
  %v329 = vadd.f32 %v319, %v328
  %v330 = vadd.f32 %v323, %v328
  %vm331 = vcmp.ge.f32.partialorder %v329, 0.0
  %vm332 = vcmp.ge.f32.partialorder %v330, 0.0
  %v333 = vmul.f32 %v329, 0.2
  %v334 = vmul.f32 %v330, 0.2
  %v335 = vsel %vm331, %v329, %v333
  %v336 = vsel %vm332, %v330, %v334
  %v337 = vadd.f32 %v335, %v35
  %v338 = vadd.f32 %v336, %v36
  %v339 = vsel %vm294, %v337, -inf
  %340 = vmax.xlane.f32.xlu0 %v339
  %v341 = vpop.xlane.xlu0 %340
  %v342 = vsel %vm294, %v338, -inf
  %343 = vmax.xlane.f32.xlu0 %v342
  %v344 = vpop.xlane.xlu0 %343
  %v345 = vsub.f32 %v337, %v341
  %v346 = vsub.f32 %v338, %v344
  %v347 = vmul.f32 %v345, 1.442695
  %v348 = vpow.pop %v347
  %v349 = vmul.f32 %v346, 1.442695
  %v350 = vpow.pop %v349
  %v351 = vsel %vm294, %v348, 0.0
  %352 = vadd.xlane.f32.xlu0 %v351
  %v353 = vpop.xlane.xlu0 %352
  %v354 = vsel %vm294, %v350, 0.0
  %355 = vadd.xlane.f32.xlu0 %v354
  %v356 = vpop.xlane.xlu0 %355
  %v357 = vrcp.pop %v353
  %v358 = vrcp.pop %v356
  %v359 = vmul.f32 %v348, %v357
  %v360 = vmul.f32 %v350, %v358
  %363 = vrot.lane.b32.xlu0 %v112, 96
  %v364 = vpop.permute.xlu0 %363
  %365 = vrot.lane.b32.xlu0 %v117, 96
  %v366 = vpop.permute.xlu0 %365
  %v370 = vsel %vm294, %v359, 0
  %v373 = vsel %vm294, %v360, 0
  %375 = vmatprep.subr.mxu0 0.0
  %376 = vmatpush1.msra.mxu0 %v364
  %377 = vmatprep.subr.mxu0 0.0
  %378 = vmatpush1.msra.mxu0 %v366
  %379 = vmatprep.subr.mxu0 0.0
  %380 = vmatpush1.msra.mxu0 0.0
  %381 = vmatprep.subr.mxu0 0.0
  %382 = vmatpush1.msra.mxu0 0.0
  %383 = vmatprep.subr.mxu0 0.0
  %384 = vmatpush1.msra.mxu0 0.0
  %385 = vmatprep.subr.mxu0 0.0
  %386 = vmatpush1.msra.mxu0 0.0
  %387 = vmatprep.subr.mxu0 0.0
  %388 = vmatpush1.msra.mxu0 0.0
  %389 = vmatprep.subr.mxu0 0.0
  %390 = vmatpush1.msra.mxu0 0.0
  %391 = vmatprep.subr.mxu0 0.0
  %392 = vmatpush1.msra.mxu0 0.0
  %393 = vmatprep.subr.mxu0 0.0
  %394 = vmatpush1.msra.mxu0 0.0
  %395 = vmatprep.subr.mxu0 0.0
  %396 = vmatpush1.msra.mxu0 0.0
  %397 = vmatprep.subr.mxu0 0.0
  %398 = vmatpush1.msra.mxu0 0.0
  %399 = vmatprep.subr.mxu0 0.0
  %400 = vmatpush1.msra.mxu0 0.0
  %401 = vmatprep.subr.mxu0 0.0
  %402 = vmatpush1.msra.mxu0 0.0
  %403 = vmatprep.subr.mxu0 0.0
  %404 = vmatpush1.msra.mxu0 0.0
  %405 = vmatprep.subr.mxu0 0.0
  %406 = vmatpush1.msra.mxu0 0.0
  %407 = vmatprep.subr.mxu0 0.0
  %408 = vmatpush1.msra.mxu0 0.0
  %409 = vmatprep.subr.mxu0 0.0
  %410 = vmatpush1.msra.mxu0 0.0
  %411 = vmatprep.subr.mxu0 0.0
  %412 = vmatpush1.msra.mxu0 0.0
  %413 = vmatprep.subr.mxu0 0.0
  %414 = vmatpush1.msra.mxu0 0.0
  %415 = vmatprep.subr.mxu0 0.0
  %416 = vmatpush1.msra.mxu0 0.0
  %417 = vmatprep.subr.mxu0 0.0
  %418 = vmatpush1.msra.mxu0 0.0
  %419 = vmatprep.subr.mxu0 0.0
  %420 = vmatpush1.msra.mxu0 0.0
  %421 = vmatprep.subr.mxu0 0.0
  %422 = vmatpush1.msra.mxu0 0.0
  %423 = vmatprep.subr.mxu0 0.0
  %424 = vmatpush1.msra.mxu0 0.0
  %425 = vmatprep.subr.mxu0 0.0
  %426 = vmatpush1.msra.mxu0 0.0
  %427 = vmatprep.subr.mxu0 0.0
  %428 = vmatpush1.msra.mxu0 0.0
  %429 = vmatprep.subr.mxu0 0.0
  %430 = vmatpush1.msra.mxu0 0.0
  %431 = vmatprep.subr.mxu0 0.0
  %432 = vmatpush1.msra.mxu0 0.0
  %433 = vmatprep.subr.mxu0 0.0
  %434 = vmatpush1.msra.mxu0 0.0
  %435 = vmatprep.subr.mxu0 0.0
  %436 = vmatpush1.msra.mxu0 0.0
  %437 = vmatprep.subr.mxu0 0.0
  %438 = vmatpush1.msra.mxu0 0.0
  %439 = vmatprep.mubr.f32.mxu0 0.0
  %440 = vmatmul.mubr.f32.gmra.mrb[0].mxu0 %v370
  %v441 = vpop.f32.mrb[0].mxu0
  %v442 = vadd.f32 0.0, %v441
  %v443 = vpop.f32.mrb[0].mxu0
  %444 = vmatprep.mubr.f32.mxu0 0.0
  %445 = vmatmul.mubr.f32.gmra.mrb[0].mxu0 %v373
  %v446 = vpop.f32.mrb[0].mxu0
  %v447 = vadd.f32 0.0, %v446
  %v448 = vpop.f32.mrb[0].mxu0
  %449 = vdwg.mxu0
  %v451 = vsel %vm294, %v315, 0
  %v454 = vsel %vm294, %v316, 0
  %456 = vmatprep.subr.mxu0 0.0
  %457 = vmatpush1.msra.mxu0 %v112
  %458 = vmatprep.subr.mxu0 0.0
  %459 = vmatpush1.msra.mxu0 %v117
  %460 = vmatprep.subr.mxu0 0.0
  %461 = vmatpush1.msra.mxu0 0.0
  %462 = vmatprep.subr.mxu0 0.0
  %463 = vmatpush1.msra.mxu0 0.0
  %464 = vmatprep.subr.mxu0 0.0
  %465 = vmatpush1.msra.mxu0 0.0
  %466 = vmatprep.subr.mxu0 0.0
  %467 = vmatpush1.msra.mxu0 0.0
  %468 = vmatprep.subr.mxu0 0.0
  %469 = vmatpush1.msra.mxu0 0.0
  %470 = vmatprep.subr.mxu0 0.0
  %471 = vmatpush1.msra.mxu0 0.0
  %472 = vmatprep.subr.mxu0 0.0
  %473 = vmatpush1.msra.mxu0 0.0
  %474 = vmatprep.subr.mxu0 0.0
  %475 = vmatpush1.msra.mxu0 0.0
  %476 = vmatprep.subr.mxu0 0.0
  %477 = vmatpush1.msra.mxu0 0.0
  %478 = vmatprep.subr.mxu0 0.0
  %479 = vmatpush1.msra.mxu0 0.0
  %480 = vmatprep.subr.mxu0 0.0
  %481 = vmatpush1.msra.mxu0 0.0
  %482 = vmatprep.subr.mxu0 0.0
  %483 = vmatpush1.msra.mxu0 0.0
  %484 = vmatprep.subr.mxu0 0.0
  %485 = vmatpush1.msra.mxu0 0.0
  %486 = vmatprep.subr.mxu0 0.0
  %487 = vmatpush1.msra.mxu0 0.0
  %488 = vmatprep.subr.mxu0 0.0
  %489 = vmatpush1.msra.mxu0 0.0
  %490 = vmatprep.subr.mxu0 0.0
  %491 = vmatpush1.msra.mxu0 0.0
  %492 = vmatprep.subr.mxu0 0.0
  %493 = vmatpush1.msra.mxu0 0.0
  %494 = vmatprep.subr.mxu0 0.0
  %495 = vmatpush1.msra.mxu0 0.0
  %496 = vmatprep.subr.mxu0 0.0
  %497 = vmatpush1.msra.mxu0 0.0
  %498 = vmatprep.subr.mxu0 0.0
  %499 = vmatpush1.msra.mxu0 0.0
  %500 = vmatprep.subr.mxu0 0.0
  %501 = vmatpush1.msra.mxu0 0.0
  %502 = vmatprep.subr.mxu0 0.0
  %503 = vmatpush1.msra.mxu0 0.0
  %504 = vmatprep.subr.mxu0 0.0
  %505 = vmatpush1.msra.mxu0 0.0
  %506 = vmatprep.subr.mxu0 0.0
  %507 = vmatpush1.msra.mxu0 0.0
  %508 = vmatprep.subr.mxu0 0.0
  %509 = vmatpush1.msra.mxu0 0.0
  %510 = vmatprep.subr.mxu0 0.0
  %511 = vmatpush1.msra.mxu0 0.0
  %512 = vmatprep.subr.mxu0 0.0
  %513 = vmatpush1.msra.mxu0 0.0
  %514 = vmatprep.subr.mxu0 0.0
  %515 = vmatpush1.msra.mxu0 0.0
  %516 = vmatprep.subr.mxu0 0.0
  %517 = vmatpush1.msra.mxu0 0.0
  %518 = vmatprep.subr.mxu0 0.0
  %519 = vmatpush1.msra.mxu0 0.0
  %520 = vmatprep.mubr.f32.mxu0 0.0
  %521 = vmatmul.mubr.f32.gmra.mrb[0].mxu0 %v451
  %v522 = vpop.f32.mrb[0].mxu0
  %v523 = vadd.f32 %v442, %v522
  %v524 = vpop.f32.mrb[0].mxu0
  %525 = vmatprep.mubr.f32.mxu0 0.0
  %526 = vmatmul.mubr.f32.gmra.mrb[0].mxu0 %v454
  %v527 = vpop.f32.mrb[0].mxu0
  %v528 = vadd.f32 %v447, %v527
  %v529 = vpop.f32.mrb[0].mxu0
  %530 = vdwg.mxu0
  %531 = vset.pattern.permute.xlu0 2
  %532 = vperm.xlu0 %531, %v188
  %v533 = vpop.permute.xlu0 %532
  %535 = vset.pattern.permute.xlu0 2
  %536 = vperm.xlu0 %535, %v193
  %v537 = vpop.permute.xlu0 %536
  %v539 = vlaneseq
  %v540 = vshrl.u32 %v539, 7
  %v541 = vsub.s32 2, %v540
  %v542 = vrot.slane %v267, %v541
  %v543 = vadd.f32 %v533, %v542
  %v544 = vadd.f32 %v537, %v542
  %vm545 = vcmp.ge.f32.partialorder %v543, 0.0
  %vm546 = vcmp.ge.f32.partialorder %v544, 0.0
  %v547 = vmul.f32 %v543, 0.2
  %v548 = vmul.f32 %v544, 0.2
  %v549 = vsel %vm545, %v543, %v547
  %v550 = vsel %vm546, %v544, %v548
  %v551 = vadd.f32 %v549, %v35
  %v552 = vadd.f32 %v550, %v36
  %v553 = vsel %vm294, %v551, -inf
  %554 = vmax.xlane.f32.xlu0 %v553
  %v555 = vpop.xlane.xlu0 %554
  %v556 = vsel %vm294, %v552, -inf
  %557 = vmax.xlane.f32.xlu0 %v556
  %v558 = vpop.xlane.xlu0 %557
  %v559 = vsub.f32 %v551, %v555
  %v560 = vsub.f32 %v552, %v558
  %v561 = vmul.f32 %v559, 1.442695
  %v562 = vpow.pop %v561
  %v563 = vmul.f32 %v560, 1.442695
  %v564 = vpow.pop %v563
  %v565 = vsel %vm294, %v562, 0.0
  %566 = vadd.xlane.f32.xlu0 %v565
  %v567 = vpop.xlane.xlu0 %566
  %v568 = vsel %vm294, %v564, 0.0
  %569 = vadd.xlane.f32.xlu0 %v568
  %v570 = vpop.xlane.xlu0 %569
  %v571 = vrcp.pop %v567
  %v572 = vrcp.pop %v570
  %v573 = vmul.f32 %v562, %v571
  %v574 = vmul.f32 %v564, %v572
  %575 = vrot.lane.b32.xlu0 %v112, 64
  %v576 = vpop.permute.xlu0 %575
  %577 = vrot.lane.b32.xlu0 %v117, 64
  %v578 = vpop.permute.xlu0 %577
  %v582 = vsel %vm294, %v573, 0
  %v585 = vsel %vm294, %v574, 0
  %587 = vmatprep.subr.mxu0 0.0
  %588 = vmatpush1.msra.mxu0 %v576
  %589 = vmatprep.subr.mxu0 0.0
  %590 = vmatpush1.msra.mxu0 %v578
  %591 = vmatprep.subr.mxu0 0.0
  %592 = vmatpush1.msra.mxu0 0.0
  %593 = vmatprep.subr.mxu0 0.0
  %594 = vmatpush1.msra.mxu0 0.0
  %595 = vmatprep.subr.mxu0 0.0
  %596 = vmatpush1.msra.mxu0 0.0
  %597 = vmatprep.subr.mxu0 0.0
  %598 = vmatpush1.msra.mxu0 0.0
  %599 = vmatprep.subr.mxu0 0.0
  %600 = vmatpush1.msra.mxu0 0.0
  %601 = vmatprep.subr.mxu0 0.0
  %602 = vmatpush1.msra.mxu0 0.0
  %603 = vmatprep.subr.mxu0 0.0
  %604 = vmatpush1.msra.mxu0 0.0
  %605 = vmatprep.subr.mxu0 0.0
  %606 = vmatpush1.msra.mxu0 0.0
  %607 = vmatprep.subr.mxu0 0.0
  %608 = vmatpush1.msra.mxu0 0.0
  %609 = vmatprep.subr.mxu0 0.0
  %610 = vmatpush1.msra.mxu0 0.0
  %611 = vmatprep.subr.mxu0 0.0
  %612 = vmatpush1.msra.mxu0 0.0
  %613 = vmatprep.subr.mxu0 0.0
  %614 = vmatpush1.msra.mxu0 0.0
  %615 = vmatprep.subr.mxu0 0.0
  %616 = vmatpush1.msra.mxu0 0.0
  %617 = vmatprep.subr.mxu0 0.0
  %618 = vmatpush1.msra.mxu0 0.0
  %619 = vmatprep.subr.mxu0 0.0
  %620 = vmatpush1.msra.mxu0 0.0
  %621 = vmatprep.subr.mxu0 0.0
  %622 = vmatpush1.msra.mxu0 0.0
  %623 = vmatprep.subr.mxu0 0.0
  %624 = vmatpush1.msra.mxu0 0.0
  %625 = vmatprep.subr.mxu0 0.0
  %626 = vmatpush1.msra.mxu0 0.0
  %627 = vmatprep.subr.mxu0 0.0
  %628 = vmatpush1.msra.mxu0 0.0
  %629 = vmatprep.subr.mxu0 0.0
  %630 = vmatpush1.msra.mxu0 0.0
  %631 = vmatprep.subr.mxu0 0.0
  %632 = vmatpush1.msra.mxu0 0.0
  %633 = vmatprep.subr.mxu0 0.0
  %634 = vmatpush1.msra.mxu0 0.0
  %635 = vmatprep.subr.mxu0 0.0
  %636 = vmatpush1.msra.mxu0 0.0
  %637 = vmatprep.subr.mxu0 0.0
  %638 = vmatpush1.msra.mxu0 0.0
  %639 = vmatprep.subr.mxu0 0.0
  %640 = vmatpush1.msra.mxu0 0.0
  %641 = vmatprep.subr.mxu0 0.0
  %642 = vmatpush1.msra.mxu0 0.0
  %643 = vmatprep.subr.mxu0 0.0
  %644 = vmatpush1.msra.mxu0 0.0
  %645 = vmatprep.subr.mxu0 0.0
  %646 = vmatpush1.msra.mxu0 0.0
  %647 = vmatprep.subr.mxu0 0.0
  %648 = vmatpush1.msra.mxu0 0.0
  %649 = vmatprep.subr.mxu0 0.0
  %650 = vmatpush1.msra.mxu0 0.0
  %651 = vmatprep.mubr.f32.mxu0 0.0
  %652 = vmatmul.mubr.f32.gmra.mrb[0].mxu0 %v582
  %v653 = vpop.f32.mrb[0].mxu0
  %v654 = vadd.f32 0.0, %v653
  %v655 = vpop.f32.mrb[0].mxu0
  %656 = vmatprep.mubr.f32.mxu0 0.0
  %657 = vmatmul.mubr.f32.gmra.mrb[0].mxu0 %v585
  %v658 = vpop.f32.mrb[0].mxu0
  %v659 = vadd.f32 0.0, %v658
  %v660 = vpop.f32.mrb[0].mxu0
  %661 = vdwg.mxu0
  %v662 = vadd.f32 %v523, %v654
  %v663 = vadd.f32 %v528, %v659
  %664 = vset.pattern.permute.xlu0 3
  %665 = vperm.xlu0 %664, %v188
  %v666 = vpop.permute.xlu0 %665
  %668 = vset.pattern.permute.xlu0 3
  %669 = vperm.xlu0 %668, %v193
  %v670 = vpop.permute.xlu0 %669
  %v672 = vlaneseq
  %v673 = vshrl.u32 %v672, 7
  %v674 = vsub.s32 3, %v673
  %v675 = vrot.slane %v267, %v674
  %v676 = vadd.f32 %v666, %v675
  %v677 = vadd.f32 %v670, %v675
  %vm678 = vcmp.ge.f32.partialorder %v676, 0.0
  %vm679 = vcmp.ge.f32.partialorder %v677, 0.0
  %v680 = vmul.f32 %v676, 0.2
  %v681 = vmul.f32 %v677, 0.2
  %v682 = vsel %vm678, %v676, %v680
  %v683 = vsel %vm679, %v677, %v681
  %v684 = vadd.f32 %v682, %v35
  %v685 = vadd.f32 %v683, %v36
  %v686 = vsel %vm294, %v684, -inf
  %687 = vmax.xlane.f32.xlu0 %v686
  %v688 = vpop.xlane.xlu0 %687
  %v689 = vsel %vm294, %v685, -inf
  %690 = vmax.xlane.f32.xlu0 %v689
  %v691 = vpop.xlane.xlu0 %690
  %v692 = vsub.f32 %v684, %v688
  %v693 = vsub.f32 %v685, %v691
  %v694 = vmul.f32 %v692, 1.442695
  %v695 = vpow.pop %v694
  %v696 = vmul.f32 %v693, 1.442695
  %v697 = vpow.pop %v696
  %v698 = vsel %vm294, %v695, 0.0
  %699 = vadd.xlane.f32.xlu0 %v698
  %v700 = vpop.xlane.xlu0 %699
  %v701 = vsel %vm294, %v697, 0.0
  %702 = vadd.xlane.f32.xlu0 %v701
  %v703 = vpop.xlane.xlu0 %702
  %v704 = vrcp.pop %v700
  %v705 = vrcp.pop %v703
  %v706 = vmul.f32 %v695, %v704
  %v707 = vmul.f32 %v697, %v705
  %708 = vrot.lane.b32.xlu0 %v112, 32
  %v709 = vpop.permute.xlu0 %708
  %710 = vrot.lane.b32.xlu0 %v117, 32
  %v711 = vpop.permute.xlu0 %710
  %v715 = vsel %vm294, %v706, 0
  %v718 = vsel %vm294, %v707, 0
  %720 = vmatprep.subr.mxu0 0.0
  %721 = vmatpush1.msra.mxu0 %v709
  %722 = vmatprep.subr.mxu0 0.0
  %723 = vmatpush1.msra.mxu0 %v711
  %724 = vmatprep.subr.mxu0 0.0
  %725 = vmatpush1.msra.mxu0 0.0
  %726 = vmatprep.subr.mxu0 0.0
  %727 = vmatpush1.msra.mxu0 0.0
  %728 = vmatprep.subr.mxu0 0.0
  %729 = vmatpush1.msra.mxu0 0.0
  %730 = vmatprep.subr.mxu0 0.0
  %731 = vmatpush1.msra.mxu0 0.0
  %732 = vmatprep.subr.mxu0 0.0
  %733 = vmatpush1.msra.mxu0 0.0
  %734 = vmatprep.subr.mxu0 0.0
  %735 = vmatpush1.msra.mxu0 0.0
  %736 = vmatprep.subr.mxu0 0.0
  %737 = vmatpush1.msra.mxu0 0.0
  %738 = vmatprep.subr.mxu0 0.0
  %739 = vmatpush1.msra.mxu0 0.0
  %740 = vmatprep.subr.mxu0 0.0
  %741 = vmatpush1.msra.mxu0 0.0
  %742 = vmatprep.subr.mxu0 0.0
  %743 = vmatpush1.msra.mxu0 0.0
  %744 = vmatprep.subr.mxu0 0.0
  %745 = vmatpush1.msra.mxu0 0.0
  %746 = vmatprep.subr.mxu0 0.0
  %747 = vmatpush1.msra.mxu0 0.0
  %748 = vmatprep.subr.mxu0 0.0
  %749 = vmatpush1.msra.mxu0 0.0
  %750 = vmatprep.subr.mxu0 0.0
  %751 = vmatpush1.msra.mxu0 0.0
  %752 = vmatprep.subr.mxu0 0.0
  %753 = vmatpush1.msra.mxu0 0.0
  %754 = vmatprep.subr.mxu0 0.0
  %755 = vmatpush1.msra.mxu0 0.0
  %756 = vmatprep.subr.mxu0 0.0
  %757 = vmatpush1.msra.mxu0 0.0
  %758 = vmatprep.subr.mxu0 0.0
  %759 = vmatpush1.msra.mxu0 0.0
  %760 = vmatprep.subr.mxu0 0.0
  %761 = vmatpush1.msra.mxu0 0.0
  %762 = vmatprep.subr.mxu0 0.0
  %763 = vmatpush1.msra.mxu0 0.0
  %764 = vmatprep.subr.mxu0 0.0
  %765 = vmatpush1.msra.mxu0 0.0
  %766 = vmatprep.subr.mxu0 0.0
  %767 = vmatpush1.msra.mxu0 0.0
  %768 = vmatprep.subr.mxu0 0.0
  %769 = vmatpush1.msra.mxu0 0.0
  %770 = vmatprep.subr.mxu0 0.0
  %771 = vmatpush1.msra.mxu0 0.0
  %772 = vmatprep.subr.mxu0 0.0
  %773 = vmatpush1.msra.mxu0 0.0
  %774 = vmatprep.subr.mxu0 0.0
  %775 = vmatpush1.msra.mxu0 0.0
  %776 = vmatprep.subr.mxu0 0.0
  %777 = vmatpush1.msra.mxu0 0.0
  %778 = vmatprep.subr.mxu0 0.0
  %779 = vmatpush1.msra.mxu0 0.0
  %780 = vmatprep.subr.mxu0 0.0
  %781 = vmatpush1.msra.mxu0 0.0
  %782 = vmatprep.subr.mxu0 0.0
  %783 = vmatpush1.msra.mxu0 0.0
  %784 = vmatprep.mubr.f32.mxu0 0.0
  %785 = vmatmul.mubr.f32.gmra.mrb[0].mxu0 %v715
  %v786 = vpop.f32.mrb[0].mxu0
  %v787 = vadd.f32 0.0, %v786
  %v788 = vpop.f32.mrb[0].mxu0
  %789 = vmatprep.mubr.f32.mxu0 0.0
  %790 = vmatmul.mubr.f32.gmra.mrb[0].mxu0 %v718
  %v791 = vpop.f32.mrb[0].mxu0
  %v792 = vadd.f32 0.0, %v791
  %v793 = vpop.f32.mrb[0].mxu0
  %794 = vdwg.mxu0
  %v795 = vadd.f32 %v662, %v787
  %v796 = vadd.f32 %v663, %v792
  %v797 = vmul.f32 %v795, 0.25
  %v798 = vmul.f32 %v796, 0.25
  %vm799 = vcmp.gt.f32.partialorder %v797, 0.0
  %vm800 = vcmp.gt.f32.partialorder %v798, 0.0
  %v801 = vmin.f32 %v797, 0.0
  %v802 = vmin.f32 %v798, 0.0
  %v803 = vmul.f32 %v801, 1.442695
  %v804 = vpow.pop %v803
  %v805 = vmul.f32 %v802, 1.442695
  %v806 = vpow.pop %v805
  %v807 = vsub.f32 %v804, 1.0
  %v808 = vsub.f32 %v806, 1.0
  %v809 = vsel %vm799, %v797, %v807
  %v810 = vsel %vm800, %v798, %v808
  %v811 = vld [vmem:[%s6] sm:$0xff]
  %v812 = vld [vmem:[%s6 + $0x8] sm:$0xff]
  %v813 = vld [vmem:[%s6 + $0x10] sm:$0xff]
  %v814 = vld [vmem:[%s6 + $0x18] sm:$0xff]
  %vm815 = vcmask 261120
  %v817 = vsel %vm815, %v809, 0
  %v820 = vsel %vm815, %v810, 0
  %822 = vmatprep.subr.mxu0 0.0
  %823 = vmatpush1.msra.mxu0 %v811
  %824 = vmatprep.subr.mxu0 0.0
  %825 = vmatpush1.msra.mxu0 %v812
  %826 = vmatprep.subr.mxu0 0.0
  %827 = vmatpush1.msra.mxu0 %v813
  %828 = vmatprep.subr.mxu0 0.0
  %829 = vmatpush1.msra.mxu0 %v814
  %830 = vmatprep.subr.mxu0 0.0
  %831 = vmatpush1.msra.mxu0 0.0
  %832 = vmatprep.subr.mxu0 0.0
  %833 = vmatpush1.msra.mxu0 0.0
  %834 = vmatprep.subr.mxu0 0.0
  %835 = vmatpush1.msra.mxu0 0.0
  %836 = vmatprep.subr.mxu0 0.0
  %837 = vmatpush1.msra.mxu0 0.0
  %838 = vmatprep.subr.mxu0 0.0
  %839 = vmatpush1.msra.mxu0 0.0
  %840 = vmatprep.subr.mxu0 0.0
  %841 = vmatpush1.msra.mxu0 0.0
  %842 = vmatprep.subr.mxu0 0.0
  %843 = vmatpush1.msra.mxu0 0.0
  %844 = vmatprep.subr.mxu0 0.0
  %845 = vmatpush1.msra.mxu0 0.0
  %846 = vmatprep.subr.mxu0 0.0
  %847 = vmatpush1.msra.mxu0 0.0
  %848 = vmatprep.subr.mxu0 0.0
  %849 = vmatpush1.msra.mxu0 0.0
  %850 = vmatprep.subr.mxu0 0.0
  %851 = vmatpush1.msra.mxu0 0.0
  %852 = vmatprep.subr.mxu0 0.0
  %853 = vmatpush1.msra.mxu0 0.0
  %854 = vmatprep.subr.mxu0 0.0
  %855 = vmatpush1.msra.mxu0 0.0
  %856 = vmatprep.subr.mxu0 0.0
  %857 = vmatpush1.msra.mxu0 0.0
  %858 = vmatprep.subr.mxu0 0.0
  %859 = vmatpush1.msra.mxu0 0.0
  %860 = vmatprep.subr.mxu0 0.0
  %861 = vmatpush1.msra.mxu0 0.0
  %862 = vmatprep.subr.mxu0 0.0
  %863 = vmatpush1.msra.mxu0 0.0
  %864 = vmatprep.subr.mxu0 0.0
  %865 = vmatpush1.msra.mxu0 0.0
  %866 = vmatprep.subr.mxu0 0.0
  %867 = vmatpush1.msra.mxu0 0.0
  %868 = vmatprep.subr.mxu0 0.0
  %869 = vmatpush1.msra.mxu0 0.0
  %870 = vmatprep.subr.mxu0 0.0
  %871 = vmatpush1.msra.mxu0 0.0
  %872 = vmatprep.subr.mxu0 0.0
  %873 = vmatpush1.msra.mxu0 0.0
  %874 = vmatprep.subr.mxu0 0.0
  %875 = vmatpush1.msra.mxu0 0.0
  %876 = vmatprep.subr.mxu0 0.0
  %877 = vmatpush1.msra.mxu0 0.0
  %878 = vmatprep.subr.mxu0 0.0
  %879 = vmatpush1.msra.mxu0 0.0
  %880 = vmatprep.subr.mxu0 0.0
  %881 = vmatpush1.msra.mxu0 0.0
  %882 = vmatprep.subr.mxu0 0.0
  %883 = vmatpush1.msra.mxu0 0.0
  %884 = vmatprep.subr.mxu0 0.0
  %885 = vmatpush1.msra.mxu0 0.0
  %886 = vmatprep.mubr.f32.mxu0 0.0
  %887 = vmatmul.mubr.f32.gmra.mrb[0].mxu0 %v817
  %v888 = vpop.f32.mrb[0].mxu0
  %v889 = vadd.f32 0.0, %v888
  %v890 = vpop.f32.mrb[0].mxu0
  %891 = vmatprep.mubr.f32.mxu0 0.0
  %892 = vmatmul.mubr.f32.gmra.mrb[0].mxu0 %v820
  %v893 = vpop.f32.mrb[0].mxu0
  %v894 = vadd.f32 0.0, %v893
  %v895 = vpop.f32.mrb[0].mxu0
  %896 = vdwg.mxu0
  %v897 = vld [vmem:[%s7] sm:$0xff]
  %v898 = vld [vmem:[%s7 + $0x8] sm:$0xff]
  %v899 = vld [vmem:[%s7 + $0x10] sm:$0xff]
  %v900 = vld [vmem:[%s7 + $0x18] sm:$0xff]
  %901 = vmatprep.subr.mxu0 0.0
  %902 = vmatpush1.msra.mxu0 %v897
  %903 = vmatprep.subr.mxu0 0.0
  %904 = vmatpush1.msra.mxu0 %v898
  %905 = vmatprep.subr.mxu0 0.0
  %906 = vmatpush1.msra.mxu0 %v899
  %907 = vmatprep.subr.mxu0 0.0
  %908 = vmatpush1.msra.mxu0 %v900
  %909 = vmatprep.subr.mxu0 0.0
  %910 = vmatpush1.msra.mxu0 0.0
  %911 = vmatprep.subr.mxu0 0.0
  %912 = vmatpush1.msra.mxu0 0.0
  %913 = vmatprep.subr.mxu0 0.0
  %914 = vmatpush1.msra.mxu0 0.0
  %915 = vmatprep.subr.mxu0 0.0
  %916 = vmatpush1.msra.mxu0 0.0
  %917 = vmatprep.subr.mxu0 0.0
  %918 = vmatpush1.msra.mxu0 0.0
  %919 = vmatprep.subr.mxu0 0.0
  %920 = vmatpush1.msra.mxu0 0.0
  %921 = vmatprep.subr.mxu0 0.0
  %922 = vmatpush1.msra.mxu0 0.0
  %923 = vmatprep.subr.mxu0 0.0
  %924 = vmatpush1.msra.mxu0 0.0
  %925 = vmatprep.subr.mxu0 0.0
  %926 = vmatpush1.msra.mxu0 0.0
  %927 = vmatprep.subr.mxu0 0.0
  %928 = vmatpush1.msra.mxu0 0.0
  %929 = vmatprep.subr.mxu0 0.0
  %930 = vmatpush1.msra.mxu0 0.0
  %931 = vmatprep.subr.mxu0 0.0
  %932 = vmatpush1.msra.mxu0 0.0
  %933 = vmatprep.subr.mxu0 0.0
  %934 = vmatpush1.msra.mxu0 0.0
  %935 = vmatprep.subr.mxu0 0.0
  %936 = vmatpush1.msra.mxu0 0.0
  %937 = vmatprep.subr.mxu0 0.0
  %938 = vmatpush1.msra.mxu0 0.0
  %939 = vmatprep.subr.mxu0 0.0
  %940 = vmatpush1.msra.mxu0 0.0
  %941 = vmatprep.subr.mxu0 0.0
  %942 = vmatpush1.msra.mxu0 0.0
  %943 = vmatprep.subr.mxu0 0.0
  %944 = vmatpush1.msra.mxu0 0.0
  %945 = vmatprep.subr.mxu0 0.0
  %946 = vmatpush1.msra.mxu0 0.0
  %947 = vmatprep.subr.mxu0 0.0
  %948 = vmatpush1.msra.mxu0 0.0
  %949 = vmatprep.subr.mxu0 0.0
  %950 = vmatpush1.msra.mxu0 0.0
  %951 = vmatprep.subr.mxu0 0.0
  %952 = vmatpush1.msra.mxu0 0.0
  %953 = vmatprep.subr.mxu0 0.0
  %954 = vmatpush1.msra.mxu0 0.0
  %955 = vmatprep.subr.mxu0 0.0
  %956 = vmatpush1.msra.mxu0 0.0
  %957 = vmatprep.subr.mxu0 0.0
  %958 = vmatpush1.msra.mxu0 0.0
  %959 = vmatprep.subr.mxu0 0.0
  %960 = vmatpush1.msra.mxu0 0.0
  %961 = vmatprep.subr.mxu0 0.0
  %962 = vmatpush1.msra.mxu0 0.0
  %963 = vmatprep.subr.mxu0 0.0
  %964 = vmatpush1.msra.mxu0 0.0
  %965 = vmatprep.mubr.f32.mxu0 0.0
  %966 = vmatmul.mubr.f32.gmra.mrb[0].mxu0 %v817
  %v967 = vpop.f32.mrb[0].mxu0
  %v968 = vadd.f32 0.0, %v967
  %v969 = vpop.f32.mrb[0].mxu0
  %970 = vmatprep.mubr.f32.mxu0 0.0
  %971 = vmatmul.mubr.f32.gmra.mrb[0].mxu0 %v820
  %v972 = vpop.f32.mrb[0].mxu0
  %v973 = vadd.f32 0.0, %v972
  %v974 = vpop.f32.mrb[0].mxu0
  %975 = vdwg.mxu0
  %v976 = vld [vmem:[%s8] sm:$0xff]
  %v977 = vld [vmem:[%s8 + $0x8] sm:$0xff]
  %v978 = vld [vmem:[%s8 + $0x10] sm:$0xff]
  %v979 = vld [vmem:[%s8 + $0x18] sm:$0xff]
  %980 = vmatprep.subr.mxu0 0.0
  %981 = vmatpush1.msra.mxu0 %v976
  %982 = vmatprep.subr.mxu0 0.0
  %983 = vmatpush1.msra.mxu0 %v977
  %984 = vmatprep.subr.mxu0 0.0
  %985 = vmatpush1.msra.mxu0 %v978
  %986 = vmatprep.subr.mxu0 0.0
  %987 = vmatpush1.msra.mxu0 %v979
  %988 = vmatprep.subr.mxu0 0.0
  %989 = vmatpush1.msra.mxu0 0.0
  %990 = vmatprep.subr.mxu0 0.0
  %991 = vmatpush1.msra.mxu0 0.0
  %992 = vmatprep.subr.mxu0 0.0
  %993 = vmatpush1.msra.mxu0 0.0
  %994 = vmatprep.subr.mxu0 0.0
  %995 = vmatpush1.msra.mxu0 0.0
  %996 = vmatprep.subr.mxu0 0.0
  %997 = vmatpush1.msra.mxu0 0.0
  %998 = vmatprep.subr.mxu0 0.0
  %999 = vmatpush1.msra.mxu0 0.0
  %1000 = vmatprep.subr.mxu0 0.0
  %1001 = vmatpush1.msra.mxu0 0.0
  %1002 = vmatprep.subr.mxu0 0.0
  %1003 = vmatpush1.msra.mxu0 0.0
  %1004 = vmatprep.subr.mxu0 0.0
  %1005 = vmatpush1.msra.mxu0 0.0
  %1006 = vmatprep.subr.mxu0 0.0
  %1007 = vmatpush1.msra.mxu0 0.0
  %1008 = vmatprep.subr.mxu0 0.0
  %1009 = vmatpush1.msra.mxu0 0.0
  %1010 = vmatprep.subr.mxu0 0.0
  %1011 = vmatpush1.msra.mxu0 0.0
  %1012 = vmatprep.subr.mxu0 0.0
  %1013 = vmatpush1.msra.mxu0 0.0
  %1014 = vmatprep.subr.mxu0 0.0
  %1015 = vmatpush1.msra.mxu0 0.0
  %1016 = vmatprep.subr.mxu0 0.0
  %1017 = vmatpush1.msra.mxu0 0.0
  %1018 = vmatprep.subr.mxu0 0.0
  %1019 = vmatpush1.msra.mxu0 0.0
  %1020 = vmatprep.subr.mxu0 0.0
  %1021 = vmatpush1.msra.mxu0 0.0
  %1022 = vmatprep.subr.mxu0 0.0
  %1023 = vmatpush1.msra.mxu0 0.0
  %1024 = vmatprep.subr.mxu0 0.0
  %1025 = vmatpush1.msra.mxu0 0.0
  %1026 = vmatprep.subr.mxu0 0.0
  %1027 = vmatpush1.msra.mxu0 0.0
  %1028 = vmatprep.subr.mxu0 0.0
  %1029 = vmatpush1.msra.mxu0 0.0
  %1030 = vmatprep.subr.mxu0 0.0
  %1031 = vmatpush1.msra.mxu0 0.0
  %1032 = vmatprep.subr.mxu0 0.0
  %1033 = vmatpush1.msra.mxu0 0.0
  %1034 = vmatprep.subr.mxu0 0.0
  %1035 = vmatpush1.msra.mxu0 0.0
  %1036 = vmatprep.subr.mxu0 0.0
  %1037 = vmatpush1.msra.mxu0 0.0
  %1038 = vmatprep.subr.mxu0 0.0
  %1039 = vmatpush1.msra.mxu0 0.0
  %1040 = vmatprep.subr.mxu0 0.0
  %1041 = vmatpush1.msra.mxu0 0.0
  %1042 = vmatprep.subr.mxu0 0.0
  %1043 = vmatpush1.msra.mxu0 0.0
  %1044 = vmatprep.mubr.f32.mxu0 0.0
  %1045 = vmatmul.mubr.f32.gmra.mrb[0].mxu0 %v817
  %v1046 = vpop.f32.mrb[0].mxu0
  %v1047 = vadd.f32 0.0, %v1046
  %v1048 = vpop.f32.mrb[0].mxu0
  %1049 = vmatprep.mubr.f32.mxu0 0.0
  %1050 = vmatmul.mubr.f32.gmra.mrb[0].mxu0 %v820
  %v1051 = vpop.f32.mrb[0].mxu0
  %v1052 = vadd.f32 0.0, %v1051
  %v1053 = vpop.f32.mrb[0].mxu0
  %1054 = vdwg.mxu0
  %1055 = vxpose.xlu0.b32.start [1/16] %v1047, 128
  %1056 = vxpose.xlu0.b32.cont [2/16] %v1052, 128
  %1057 = vxpose.xlu0.b32.cont [3/16] 0.0, 128
  %1058 = vxpose.xlu0.b32.cont [4/16] 0.0, 128
  %1059 = vxpose.xlu0.b32.cont [5/16] 0.0, 128
  %1060 = vxpose.xlu0.b32.cont [6/16] 0.0, 128
  %1061 = vxpose.xlu0.b32.cont [7/16] 0.0, 128
  %1062 = vxpose.xlu0.b32.cont [8/16] 0.0, 128
  %1063 = vxpose.xlu0.b32.cont [9/16] 0.0, 128
  %1064 = vxpose.xlu0.b32.cont [10/16] 0.0, 128
  %1065 = vxpose.xlu0.b32.cont [11/16] 0.0, 128
  %1066 = vxpose.xlu0.b32.cont [12/16] 0.0, 128
  %1067 = vxpose.xlu0.b32.cont [13/16] 0.0, 128
  %1068 = vxpose.xlu0.b32.cont [14/16] 0.0, 128
  %1069 = vxpose.xlu0.b32.cont [15/16] 0.0, 128
  %1070 = vxpose.xlu0.b32.end [16/16] 0.0, 128
  %v1071 = vpop.trf.xlu0
  %v1072 = vpop.trf.xlu0
  %v1073 = vpop.trf.xlu0
  %v1074 = vpop.trf.xlu0
  %v1075 = vpop.trf.xlu0
  %v1076 = vpop.trf.xlu0
  %v1077 = vpop.trf.xlu0
  %v1078 = vpop.trf.xlu0
  %v1079 = vpop.trf.xlu0
  %v1080 = vpop.trf.xlu0
  %v1081 = vpop.trf.xlu0
  %v1082 = vpop.trf.xlu0
  %v1083 = vpop.trf.xlu0
  %v1084 = vpop.trf.xlu0
  %v1085 = vpop.trf.xlu0
  %v1086 = vpop.trf.xlu0
  %1088 = vset.pattern.permute.xlu0 0
  %1089 = vperm.xlu0 %1088, %v968
  %v1090 = vpop.permute.xlu0 %1089
  %1093 = vset.pattern.permute.xlu0 0
  %1094 = vperm.xlu0 %1093, %v973
  %v1095 = vpop.permute.xlu0 %1094
  %v1097 = vlaneseq
  %v1098 = vshrl.u32 %v1097, 7
  %v1099 = vsub.s32 0, %v1098
  %v1100 = vrot.slane %v1071, %v1099
  %v1101 = vadd.f32 %v1090, %v1100
  %v1102 = vadd.f32 %v1095, %v1100
  %vm1103 = vcmp.ge.f32.partialorder %v1101, 0.0
  %vm1104 = vcmp.ge.f32.partialorder %v1102, 0.0
  %v1105 = vmul.f32 %v1101, 0.2
  %v1106 = vmul.f32 %v1102, 0.2
  %v1107 = vsel %vm1103, %v1101, %v1105
  %v1108 = vsel %vm1104, %v1102, %v1106
  %v1109 = vadd.f32 %v1107, %v35
  %v1110 = vadd.f32 %v1108, %v36
  %v1111 = vsel %vm294, %v1109, -inf
  %1112 = vmax.xlane.f32.xlu0 %v1111
  %v1113 = vpop.xlane.xlu0 %1112
  %v1114 = vsel %vm294, %v1110, -inf
  %1115 = vmax.xlane.f32.xlu0 %v1114
  %v1116 = vpop.xlane.xlu0 %1115
  %v1117 = vsub.f32 %v1109, %v1113
  %v1118 = vsub.f32 %v1110, %v1116
  %v1119 = vmul.f32 %v1117, 1.442695
  %v1120 = vpow.pop %v1119
  %v1121 = vmul.f32 %v1118, 1.442695
  %v1122 = vpow.pop %v1121
  %v1123 = vsel %vm294, %v1120, 0.0
  %1124 = vadd.xlane.f32.xlu0 %v1123
  %v1125 = vpop.xlane.xlu0 %1124
  %v1126 = vsel %vm294, %v1122, 0.0
  %1127 = vadd.xlane.f32.xlu0 %v1126
  %v1128 = vpop.xlane.xlu0 %1127
  %v1129 = vrcp.pop %v1125
  %v1130 = vrcp.pop %v1128
  %v1131 = vmul.f32 %v1120, %v1129
  %v1132 = vmul.f32 %v1122, %v1130
  %v1134 = vsel %vm294, %v1131, 0
  %v1137 = vsel %vm294, %v1132, 0
  %1139 = vmatprep.subr.mxu0 0.0
  %1140 = vmatpush1.msra.mxu0 %v889
  %1141 = vmatprep.subr.mxu0 0.0
  %1142 = vmatpush1.msra.mxu0 %v894
  %1143 = vmatprep.subr.mxu0 0.0
  %1144 = vmatpush1.msra.mxu0 0.0
  %1145 = vmatprep.subr.mxu0 0.0
  %1146 = vmatpush1.msra.mxu0 0.0
  %1147 = vmatprep.subr.mxu0 0.0
  %1148 = vmatpush1.msra.mxu0 0.0
  %1149 = vmatprep.subr.mxu0 0.0
  %1150 = vmatpush1.msra.mxu0 0.0
  %1151 = vmatprep.subr.mxu0 0.0
  %1152 = vmatpush1.msra.mxu0 0.0
  %1153 = vmatprep.subr.mxu0 0.0
  %1154 = vmatpush1.msra.mxu0 0.0
  %1155 = vmatprep.subr.mxu0 0.0
  %1156 = vmatpush1.msra.mxu0 0.0
  %1157 = vmatprep.subr.mxu0 0.0
  %1158 = vmatpush1.msra.mxu0 0.0
  %1159 = vmatprep.subr.mxu0 0.0
  %1160 = vmatpush1.msra.mxu0 0.0
  %1161 = vmatprep.subr.mxu0 0.0
  %1162 = vmatpush1.msra.mxu0 0.0
  %1163 = vmatprep.subr.mxu0 0.0
  %1164 = vmatpush1.msra.mxu0 0.0
  %1165 = vmatprep.subr.mxu0 0.0
  %1166 = vmatpush1.msra.mxu0 0.0
  %1167 = vmatprep.subr.mxu0 0.0
  %1168 = vmatpush1.msra.mxu0 0.0
  %1169 = vmatprep.subr.mxu0 0.0
  %1170 = vmatpush1.msra.mxu0 0.0
  %1171 = vmatprep.subr.mxu0 0.0
  %1172 = vmatpush1.msra.mxu0 0.0
  %1173 = vmatprep.subr.mxu0 0.0
  %1174 = vmatpush1.msra.mxu0 0.0
  %1175 = vmatprep.subr.mxu0 0.0
  %1176 = vmatpush1.msra.mxu0 0.0
  %1177 = vmatprep.subr.mxu0 0.0
  %1178 = vmatpush1.msra.mxu0 0.0
  %1179 = vmatprep.subr.mxu0 0.0
  %1180 = vmatpush1.msra.mxu0 0.0
  %1181 = vmatprep.subr.mxu0 0.0
  %1182 = vmatpush1.msra.mxu0 0.0
  %1183 = vmatprep.subr.mxu0 0.0
  %1184 = vmatpush1.msra.mxu0 0.0
  %1185 = vmatprep.subr.mxu0 0.0
  %1186 = vmatpush1.msra.mxu0 0.0
  %1187 = vmatprep.subr.mxu0 0.0
  %1188 = vmatpush1.msra.mxu0 0.0
  %1189 = vmatprep.subr.mxu0 0.0
  %1190 = vmatpush1.msra.mxu0 0.0
  %1191 = vmatprep.subr.mxu0 0.0
  %1192 = vmatpush1.msra.mxu0 0.0
  %1193 = vmatprep.subr.mxu0 0.0
  %1194 = vmatpush1.msra.mxu0 0.0
  %1195 = vmatprep.subr.mxu0 0.0
  %1196 = vmatpush1.msra.mxu0 0.0
  %1197 = vmatprep.subr.mxu0 0.0
  %1198 = vmatpush1.msra.mxu0 0.0
  %1199 = vmatprep.subr.mxu0 0.0
  %1200 = vmatpush1.msra.mxu0 0.0
  %1201 = vmatprep.subr.mxu0 0.0
  %1202 = vmatpush1.msra.mxu0 0.0
  %1203 = vmatprep.mubr.f32.mxu0 0.0
  %1204 = vmatmul.mubr.f32.gmra.mrb[0].mxu0 %v1134
  %v1205 = vpop.f32.mrb[0].mxu0
  %v1206 = vadd.f32 0.0, %v1205
  %v1207 = vpop.f32.mrb[0].mxu0
  %1208 = vmatprep.mubr.f32.mxu0 0.0
  %1209 = vmatmul.mubr.f32.gmra.mrb[0].mxu0 %v1137
  %v1210 = vpop.f32.mrb[0].mxu0
  %v1211 = vadd.f32 0.0, %v1210
  %v1212 = vpop.f32.mrb[0].mxu0
  %1213 = vdwg.mxu0
  %1214 = vst [vmem:[%s9] sm:$0xff] %v1206
  %1215 = vst [vmem:[%s9 + $0x8] sm:$0xff] %v1211
  // Predicated region
  $region38: #{gat_forward.1} parent=0 // pred_check
    _
  $region39: #{gat_forward.1} parent=0 // pred_check_branch
    %1217 = sbr.rel (0) target = $region41
  $region40: #{gat_forward.1} parent=0 // pred_region
    _
  $region41: #{gat_forward.1} parent=0 // pred_fallthru
    _
  // Predicated region
  $region42: #{gat_forward.1} parent=0 // pred_check
    _
  $region43: #{gat_forward.1} parent=0 // pred_check_branch
    %1219 = sbr.rel (0) target = $region45
  $region44: #{gat_forward.1} parent=0 // pred_region
    _
  $region45: #{gat_forward.1} parent=0 // pred_fallthru
    _

</llo_original>
